<compile_context>
chip_gen: v7x
topology: tpu7x:2x2x1
jax: 0.10.0
libtpu: 0.0.40
codegen_flags: <defaults>
</compile_context>

<pallas_src>
import jax
import jax.numpy as jnp
from jax.experimental import pallas as pl
from jax.experimental.pallas import tpu as pltpu

HIDDEN = 32          # GRU hidden size (4*HIDDEN must equal 128 for the fused-gate lane layout)
VOCAB = 64           # vocabulary size (must be <= 128 for the padded output projection)
LANES = 128          # TPU lane width
MATMUL_PRECISION = jax.lax.Precision.HIGHEST   # true f32 matmuls; MXU is ~idle, so ~free

assert 4 * HIDDEN == LANES
assert VOCAB <= LANES

# Row layout of the packed parameter slab (f32, LANES lanes wide):
WG_OFF = 0                        # rows [0, H)   x-side gate weights  [W_ir | W_iz | W_in |  0  ]
#                                   rows [H, 2H)  h-side gate weights  [W_hr | W_hz |  0   | W_hn]
WOUT_OFF = 2 * HIDDEN             # rows [2H, 3H) output projection (pad cols = 0)
B_GATE_ROW = 3 * HIDDEN           # row 3H        fused gate biases (1, 4H)
B_OUT_ROW = 3 * HIDDEN + 1        # row 3H+1      output bias (pad lanes = -1e30)
EMB_OFF = ((B_OUT_ROW + 1 + 7) // 8) * 8    # embedding start, (8,128)-tile aligned -> 104
SLAB_ROWS = EMB_OFF + VOCAB       # 168 rows (multiple of 8), ~84 KB f32


def decoder_kernel(tok_ref,       # SMEM (T,) int32: token ids (scalar-prefetched, pre-clamped)
                   slab_ref,      # VMEM (SLAB_ROWS, 128) f32: packed parameters (resident)
                   h0_ref,        # VMEM (1, H) f32: initial hidden state
                   logp_ref,      # out  (1, 128) f32 view of step t: padded log-probs
                   hout_ref,      # out  (1, H) f32: final hidden state
                   h_vmem):       # VMEM scratch (1, H) f32: hidden carry across grid steps
    H = HIDDEN
    t = pl.program_id(0)

    @pl.when(t == 0)
    def _init():                  # load the caller's hidden state once
        h_vmem[...] = h0_ref[...]

    tok = tok_ref[t]

    # Static views into the resident parameter slab.
    wx     = slab_ref[WG_OFF:WG_OFF + H, :]             # (H, 128) x-side gate weights
    wh     = slab_ref[WG_OFF + H:WG_OFF + 2 * H, :]     # (H, 128) h-side gate weights
    wout   = slab_ref[WOUT_OFF:WOUT_OFF + H, :]         # (H, 128)
    b_gate = slab_ref[B_GATE_ROW:B_GATE_ROW + 1, :]     # (1, 128)
    b_out  = slab_ref[B_OUT_ROW:B_OUT_ROW + 1, :]       # (1, 128)

    # Embedding lookup (dynamic sublane gather from a tile-aligned table) + ReLU.
    emb_row = slab_ref[pl.ds(EMB_OFF + tok, 1), :]      # (1, 128); lanes [0:H) hold the row
    x = jnp.maximum(emb_row[:, :H], 0.0)                # (1, H)   F.relu
    h = h_vmem[...]                                     # (1, H)   previous hidden

    # Fused gate pre-activations, lanes = [r | z | n_x | n_h]; two small MXU pushes, no concat.
    pre = (jnp.dot(x, wx, preferred_element_type=jnp.float32, precision=MATMUL_PRECISION)
           + jnp.dot(h, wh, preferred_element_type=jnp.float32, precision=MATMUL_PRECISION)
           + b_gate)                                    # (1, 4H)

    # GRU gates (PyTorch nn.GRU semantics); r and z share one sigmoid EUP push.
    sz = jax.nn.sigmoid(pre[:, 0:2 * H])
    r = sz[:, 0:H]
    z = sz[:, H:2 * H]
    n = jnp.tanh(pre[:, 2 * H:3 * H] + r * pre[:, 3 * H:4 * H])
    h_new = (1.0 - z) * n + z * h                       # (1, H)
    h_vmem[...] = h_new                                 # carry to next grid step

    # Linear(hidden -> vocab, padded to 128 lanes) + log_softmax.
    # Pad cols of wout are 0 and pad biases are -1e30 -> exp underflows to exactly 0, so the
    # 128-lane softmax equals the V-lane softmax.  (Relies on real logits >> -1e30.)
    logits = (jnp.dot(h_new, wout, preferred_element_type=jnp.float32,
                      precision=MATMUL_PRECISION) + b_out)      # (1, 128)
    m = jnp.max(logits, axis=1, keepdims=True)
    lse = jnp.log(jnp.sum(jnp.exp(logits - m), axis=1, keepdims=True)) + m
    logp_ref[...] = logits - lse

    @pl.when(t == pl.num_programs(0) - 1)
    def _finalize():
        hout_ref[...] = h_new


def init_params(key, hidden_size=HIDDEN, vocab_size=VOCAB):
    """Raw parameters in PyTorch layout (gate order r, z, n; weights are (out, in))."""
    ks = jax.random.split(key, 7)
    scale = 1.0 / jnp.sqrt(jnp.float32(hidden_size))
    return dict(
        emb=jax.random.normal(ks[0], (vocab_size, hidden_size), jnp.float32),
        w_ih=jax.random.uniform(ks[1], (3 * hidden_size, hidden_size), jnp.float32, -scale, scale),
        w_hh=jax.random.uniform(ks[2], (3 * hidden_size, hidden_size), jnp.float32, -scale, scale),
        b_ih=jax.random.uniform(ks[3], (3 * hidden_size,), jnp.float32, -scale, scale),
        b_hh=jax.random.uniform(ks[4], (3 * hidden_size,), jnp.float32, -scale, scale),
        w_out=jax.random.uniform(ks[5], (vocab_size, hidden_size), jnp.float32, -scale, scale),
        b_out=jax.random.uniform(ks[6], (vocab_size,), jnp.float32, -scale, scale),
    )


def pack_params(p):
    """Pack all parameters into a single (SLAB_ROWS, 128) f32 slab: one DMA, VMEM-resident."""
    H, V = HIDDEN, VOCAB
    w_ih, w_hh = p["w_ih"], p["w_hh"]
    w_ir, w_iz, w_in = w_ih[0:H], w_ih[H:2 * H], w_ih[2 * H:3 * H]
    w_hr, w_hz, w_hn = w_hh[0:H], w_hh[H:2 * H], w_hh[2 * H:3 * H]
    zeros = jnp.zeros((H, H), jnp.float32)
    # Rows [0,H) multiply x; rows [H,2H) multiply h.  Columns: [r | z | n_x | n_h].
    wx = jnp.concatenate([w_ir.T, w_iz.T, w_in.T, zeros], axis=1)   # (H, 4H)
    wh = jnp.concatenate([w_hr.T, w_hz.T, zeros, w_hn.T], axis=1)   # (H, 4H)

    b_ih, b_hh = p["b_ih"], p["b_hh"]
    b_gate = jnp.concatenate([
        b_ih[0:H] + b_hh[0:H],            # r bias (foldable)
        b_ih[H:2 * H] + b_hh[H:2 * H],    # z bias (foldable)
        b_ih[2 * H:3 * H],                # n input bias
        b_hh[2 * H:3 * H],                # n hidden bias (kept separate: scaled by r)
    ]).reshape(1, 4 * H)

    wout = jnp.zeros((H, LANES), jnp.float32).at[:, :V].set(p["w_out"].T)
    bout = jnp.full((1, LANES), -1e30, jnp.float32).at[0, :V].set(p["b_out"])
    pad = jnp.zeros((EMB_OFF - (B_OUT_ROW + 1), LANES), jnp.float32)   # align emb to 8-row tile
    emb = jnp.zeros((V, LANES), jnp.float32).at[:, :H].set(p["emb"])

    slab = jnp.concatenate([wx, wh, wout, b_gate, bout, pad, emb], axis=0)
    assert slab.shape == (SLAB_ROWS, LANES)
    return slab


@jax.jit
def decode_sequence(tokens, hidden, slab):
    """Run T teacher-forced decoder steps in ONE pallas_call.

    tokens: (T,) int; hidden: (1, 1, H) f32; slab: packed params.
    Returns (log_probs (T, V), final hidden (1, 1, H)) == T sequential Decoder.forward calls.
    """
    H, V = HIDDEN, VOCAB
    toks = jnp.clip(jnp.asarray(tokens, jnp.int32).reshape(-1), 0, V - 1)  # OOB guard
    T = toks.shape[0]
    h0 = hidden.reshape(1, H).astype(jnp.float32)

    logp_pad, h_fin = pl.pallas_call(
        decoder_kernel,
        out_shape=(
            jax.ShapeDtypeStruct((T, 1, LANES), jnp.float32),   # per-step padded log-probs
            jax.ShapeDtypeStruct((1, H), jnp.float32),          # final hidden state
        ),
        grid_spec=pltpu.PrefetchScalarGridSpec(
            num_scalar_prefetch=1,                # token ids -> SMEM before the grid runs
            grid=(T,),
            in_specs=[
                # Parameter slab: constant block -> DMA'd once, VMEM-resident for all steps.
                pl.BlockSpec((SLAB_ROWS, LANES), lambda t, _: (0, 0)),
                # Initial hidden state: constant block.
                pl.BlockSpec((1, H), lambda t, _: (0, 0)),
            ],
            out_specs=(
                # One lane-dense 128-wide log-prob row per grid step.
                pl.BlockSpec((None, 1, LANES), lambda t, _: (t, 0, 0)),
                # Final hidden: constant block, written back once after the last step.
                pl.BlockSpec((1, H), lambda t, _: (0, 0)),
            ),
            scratch_shapes=[pltpu.VMEM((1, H), jnp.float32)],   # hidden carry across steps
        ),
        compiler_params=pltpu.CompilerParams(
            dimension_semantics=("arbitrary",),   # recurrence: steps are sequential
        ),
    )(toks, slab, h0)

    return logp_pad[:, 0, :V], h_fin.reshape(1, 1, H)


def decoder_forward(token, hidden, slab):
    """Single Decoder.forward step (matches the PyTorch module interface): T = 1."""
    log_probs, new_hidden = decode_sequence(token, hidden, slab)
    return log_probs, new_hidden          # (1, V), (1, 1, H)


def decoder_reference(p, token, hidden):
    """Pure-JAX reference with PyTorch nn.GRU / nn.Linear / LogSoftmax semantics (f32 matmuls)."""
    H = HIDDEN
    hi = jax.lax.Precision.HIGHEST
    x = jnp.maximum(p["emb"][token[0]], 0.0).reshape(1, H)
    h = hidden.reshape(1, H)
    gi = jnp.dot(x, p["w_ih"].T, precision=hi) + p["b_ih"]
    gh = jnp.dot(h, p["w_hh"].T, precision=hi) + p["b_hh"]
    r = jax.nn.sigmoid(gi[:, 0:H] + gh[:, 0:H])
    z = jax.nn.sigmoid(gi[:, H:2 * H] + gh[:, H:2 * H])
    n = jnp.tanh(gi[:, 2 * H:3 * H] + r * gh[:, 2 * H:3 * H])
    h_new = (1.0 - z) * n + z * h
    logits = jnp.dot(h_new, p["w_out"].T, precision=hi) + p["b_out"]
    return jax.nn.log_softmax(logits, axis=1), h_new.reshape(1, 1, H)


if __name__ == "__main__":
    key = jax.random.PRNGKey(0)
    params = init_params(key)
    slab = pack_params(params)

    # ---- Single-step forward (exact module semantics) -------------------------------------
    token = jnp.array([3], dtype=jnp.int32)            # single input token id
    hidden0 = jnp.zeros((1, 1, HIDDEN), jnp.float32)   # Decoder.init_hidden_state()

    log_probs, new_hidden = decoder_forward(token, hidden0, slab)
    jax.block_until_ready((log_probs, new_hidden))
    assert log_probs.shape == (1, VOCAB)
    assert new_hidden.shape == (1, 1, HIDDEN)

    ref_logp, ref_h = decoder_reference(params, token, hidden0)
    assert jnp.allclose(log_probs, ref_logp, atol=2e-5, rtol=2e-5)
    assert jnp.allclose(new_hidden, ref_h, atol=2e-5, rtol=2e-5)

    # ---- Fused multi-step decode (T steps in one pallas_call) vs. stepping the reference ---
    T = 8
    tokens = jax.random.randint(jax.random.PRNGKey(1), (T,), 0, VOCAB, dtype=jnp.int32)
    logp_seq, h_fin = decode_sequence(tokens, hidden0, slab)
    jax.block_until_ready((logp_seq, h_fin))
    assert logp_seq.shape == (T, VOCAB)
    assert h_fin.shape == (1, 1, HIDDEN)

    h_ref = hidden0
    for t in range(T):
        ref_lp, h_ref = decoder_reference(params, tokens[t:t + 1], h_ref)
        assert jnp.allclose(logp_seq[t:t + 1], ref_lp, atol=1e-4, rtol=1e-4)
    assert jnp.allclose(h_fin, h_ref, atol=1e-4, rtol=1e-4)

    print("KERNEL_OK")
</pallas_src>

<mosaic_0001>
module attributes {stable_mosaic.version = 11 : i64} {
  func.func @decoder_kernel(%arg0: i32, %arg1: memref<1xi32, #tpu.memory_space<smem>>, %arg2: memref<168x128xf32, #tpu.memory_space<vmem>>, %arg3: memref<1x32xf32, #tpu.memory_space<vmem>>, %arg4: memref<1x1x128xf32, #tpu.memory_space<vmem>>, %arg5: memref<1x32xf32, #tpu.memory_space<vmem>>, %arg6: memref<1x32xf32, #tpu.memory_space<vmem>>) attributes {dimension_semantics = [#tpu.dimension_semantics<arbitrary>], iteration_bounds = array<i64: 1>, scalar_prefetch = 1 : i64, scratch_operands = 1 : i64, tpu.core_type = #tpu.core_type<tc>, window_params = [{pipeline_mode = #tpu.pipeline_mode<synchronous>, transform_indices = @transform_0, window_bounds = array<i64: 168, 128>}, {pipeline_mode = #tpu.pipeline_mode<synchronous>, transform_indices = @transform_1, window_bounds = array<i64: 1, 32>}, {transform_indices = @transform_2, window_bounds = array<i64: 1, 1, 128>}, {pipeline_mode = #tpu.pipeline_mode<synchronous>, transform_indices = @transform_3, window_bounds = array<i64: 1, 32>}]} {
    %c0_i32 = arith.constant 0 : i32
    %0 = arith.cmpi eq, %arg0, %c0_i32 : i32
    %1 = arith.extui %0 : i1 to i32
    %c0_i32_0 = arith.constant 0 : i32
    %2 = arith.cmpi ne, %1, %c0_i32_0 : i32
    scf.if %2 {
      %c0_23 = arith.constant 0 : index
      %c0_24 = arith.constant 0 : index
      %59 = vector.load %arg3[%c0_23, %c0_24] : memref<1x32xf32, #tpu.memory_space<vmem>>, vector<1x32xf32>
      %c0_25 = arith.constant 0 : index
      %c0_26 = arith.constant 0 : index
      %60 = vector.load %arg6[%c0_25, %c0_26] : memref<1x32xf32, #tpu.memory_space<vmem>>, vector<1x32xf32>
      tpu.vector_store %arg6[%c0_25, %c0_26], %59 {strides = array<i32>} : memref<1x32xf32, #tpu.memory_space<vmem>>, vector<1x32xf32>,
    } else {
    }
    %3 = arith.index_cast %arg0 : i32 to index
    %4 = memref.load %arg1[%3] : memref<1xi32, #tpu.memory_space<smem>>
    %c0 = arith.constant 0 : index
    %c0_1 = arith.constant 0 : index
    %5 = vector.load %arg2[%c0, %c0_1] : memref<168x128xf32, #tpu.memory_space<vmem>>, vector<32x128xf32>
    %c32 = arith.constant 32 : index
    %c0_2 = arith.constant 0 : index
    %6 = vector.load %arg2[%c32, %c0_2] : memref<168x128xf32, #tpu.memory_space<vmem>>, vector<32x128xf32>
    %c64 = arith.constant 64 : index
    %c0_3 = arith.constant 0 : index
    %7 = vector.load %arg2[%c64, %c0_3] : memref<168x128xf32, #tpu.memory_space<vmem>>, vector<32x128xf32>
    %c96 = arith.constant 96 : index
    %c0_4 = arith.constant 0 : index
    %8 = vector.load %arg2[%c96, %c0_4] : memref<168x128xf32, #tpu.memory_space<vmem>>, vector<1x128xf32>
    %c97 = arith.constant 97 : index
    %c0_5 = arith.constant 0 : index
    %9 = vector.load %arg2[%c97, %c0_5] : memref<168x128xf32, #tpu.memory_space<vmem>>, vector<1x128xf32>
    %c104_i32 = arith.constant 104 : i32
    %10 = arith.addi %c104_i32, %4 : i32
    %11 = arith.index_cast %10 : i32 to index
    %c0_6 = arith.constant 0 : index
    %12 = vector.load %arg2[%11, %c0_6] : memref<168x128xf32, #tpu.memory_space<vmem>>, vector<1x128xf32>
    %13 = vector.extract_strided_slice %12 {offsets = [0, 0], sizes = [1, 32], strides = [1, 1]} : vector<1x128xf32> to vector<1x32xf32>
    %cst = arith.constant 0.000000e+00 : f32
    %14 = vector.broadcast %cst : f32 to vector<1x32xf32>
    %15 = arith.maximumf %13, %14 : vector<1x32xf32>
    %c0_7 = arith.constant 0 : index
    %c0_8 = arith.constant 0 : index
    %16 = vector.load %arg6[%c0_7, %c0_8] : memref<1x32xf32, #tpu.memory_space<vmem>>, vector<1x32xf32>
    %cst_9 = arith.constant dense<0.000000e+00> : vector<1x128xf32>
    %17 = tpu.matmul %15, %5, %cst_9 {dimension_numbers = #tpu.dot_dimension_numbers<[1], [0], [0], [1], [0, 0, 1, 1], [], []>, precision = #tpu.contract_precision<fp32>} : vector<1x32xf32>, vector<32x128xf32>, vector<1x128xf32> -> vector<1x128xf32>
    %cst_10 = arith.constant dense<0.000000e+00> : vector<1x128xf32>
    %18 = tpu.matmul %16, %6, %cst_10 {dimension_numbers = #tpu.dot_dimension_numbers<[1], [0], [0], [1], [0, 0, 1, 1], [], []>, precision = #tpu.contract_precision<fp32>} : vector<1x32xf32>, vector<32x128xf32>, vector<1x128xf32> -> vector<1x128xf32>
    %19 = arith.addf %17, %18 : vector<1x128xf32>
    %20 = arith.addf %19, %8 : vector<1x128xf32>
    %21 = vector.extract_strided_slice %20 {offsets = [0, 0], sizes = [1, 64], strides = [1, 1]} : vector<1x128xf32> to vector<1x64xf32>
    %22 = arith.negf %21 : vector<1x64xf32>
    %23 = math.exp %22 : vector<1x64xf32>
    %cst_11 = arith.constant 1.000000e+00 : f32
    %24 = vector.broadcast %cst_11 : f32 to vector<1x64xf32>
    %25 = arith.addf %24, %23 : vector<1x64xf32>
    %26 = arith.divf %24, %25 : vector<1x64xf32>
    %27 = vector.extract_strided_slice %26 {offsets = [0, 0], sizes = [1, 32], strides = [1, 1]} : vector<1x64xf32> to vector<1x32xf32>
    %28 = vector.extract_strided_slice %26 {offsets = [0, 32], sizes = [1, 32], strides = [1, 1]} : vector<1x64xf32> to vector<1x32xf32>
    %29 = vector.extract_strided_slice %20 {offsets = [0, 64], sizes = [1, 32], strides = [1, 1]} : vector<1x128xf32> to vector<1x32xf32>
    %30 = vector.extract_strided_slice %20 {offsets = [0, 96], sizes = [1, 32], strides = [1, 1]} : vector<1x128xf32> to vector<1x32xf32>
    %31 = arith.mulf %27, %30 : vector<1x32xf32>
    %32 = arith.addf %29, %31 : vector<1x32xf32>
    %33 = math.tanh %32 : vector<1x32xf32>
    %cst_12 = arith.constant 1.000000e+00 : f32
    %34 = vector.broadcast %cst_12 : f32 to vector<1x32xf32>
    %35 = arith.subf %34, %28 : vector<1x32xf32>
    %36 = arith.mulf %35, %33 : vector<1x32xf32>
    %37 = arith.mulf %28, %16 : vector<1x32xf32>
    %38 = arith.addf %36, %37 : vector<1x32xf32>
    %c0_13 = arith.constant 0 : index
    %c0_14 = arith.constant 0 : index
    %39 = vector.load %arg6[%c0_13, %c0_14] : memref<1x32xf32, #tpu.memory_space<vmem>>, vector<1x32xf32>
    tpu.vector_store %arg6[%c0_13, %c0_14], %38 {strides = array<i32>} : memref<1x32xf32, #tpu.memory_space<vmem>>, vector<1x32xf32>,
    %cst_15 = arith.constant dense<0.000000e+00> : vector<1x128xf32>
    %40 = tpu.matmul %38, %7, %cst_15 {dimension_numbers = #tpu.dot_dimension_numbers<[1], [0], [0], [1], [0, 0, 1, 1], [], []>, precision = #tpu.contract_precision<fp32>} : vector<1x32xf32>, vector<32x128xf32>, vector<1x128xf32> -> vector<1x128xf32>
    %41 = arith.addf %40, %9 : vector<1x128xf32>
    %cst_16 = arith.constant dense<0xFF800000> : vector<1xf32>
    %42 = vector.multi_reduction <maximumf>, %41, %cst_16 [1] : vector<1x128xf32> to vector<1xf32>
    %43 = vector.shape_cast %42 : vector<1xf32> to vector<1x1xf32>
    %44 = vector.broadcast %43 : vector<1x1xf32> to vector<1x128xf32>
    %45 = arith.subf %41, %44 : vector<1x128xf32>
    %46 = math.exp %45 : vector<1x128xf32>
    %cst_17 = arith.constant dense<0.000000e+00> : vector<1xf32>
    %47 = vector.multi_reduction <add>, %46, %cst_17 [1] : vector<1x128xf32> to vector<1xf32>
    %48 = vector.shape_cast %47 : vector<1xf32> to vector<1x1xf32>
    %49 = math.log %48 : vector<1x1xf32>
    %50 = arith.addf %49, %43 : vector<1x1xf32>
    %51 = vector.broadcast %50 : vector<1x1xf32> to vector<1x128xf32>
    %52 = arith.subf %41, %51 : vector<1x128xf32>
    %c0_18 = arith.constant 0 : index
    %c0_19 = arith.constant 0 : index
    %c0_20 = arith.constant 0 : index
    %53 = vector.load %arg4[%c0_18, %c0_19, %c0_20] : memref<1x1x128xf32, #tpu.memory_space<vmem>>, vector<1x1x128xf32>
    %54 = vector.shape_cast %53 : vector<1x1x128xf32> to vector<1x128xf32>
    %55 = vector.shape_cast %52 : vector<1x128xf32> to vector<1x1x128xf32>
    tpu.vector_store %arg4[%c0_18, %c0_19, %c0_20], %55 {strides = array<i32>} : memref<1x1x128xf32, #tpu.memory_space<vmem>>, vector<1x1x128xf32>,
    %c0_i32_21 = arith.constant 0 : i32
    %56 = arith.cmpi eq, %arg0, %c0_i32_21 : i32
    %57 = arith.extui %56 : i1 to i32
    %c0_i32_22 = arith.constant 0 : i32
    %58 = arith.cmpi ne, %57, %c0_i32_22 : i32
    scf.if %58 {
      %c0_23 = arith.constant 0 : index
      %c0_24 = arith.constant 0 : index
      %59 = vector.load %arg5[%c0_23, %c0_24] : memref<1x32xf32, #tpu.memory_space<vmem>>, vector<1x32xf32>
      tpu.vector_store %arg5[%c0_23, %c0_24], %38 {strides = array<i32>} : memref<1x32xf32, #tpu.memory_space<vmem>>, vector<1x32xf32>,
    } else {
    }
    return
  }
  func.func @transform_0(%arg0: i32, %arg1: memref<1xi32, #tpu.memory_space<smem>>) -> (i32, i32) {
    %c0_i32 = arith.constant 0 : i32
    %c0_i32_0 = arith.constant 0 : i32
    %c0_i32_1 = arith.constant 0 : i32
    return %c0_i32, %c0_i32_0 : i32, i32
  }
  func.func @transform_1(%arg0: i32, %arg1: memref<1xi32, #tpu.memory_space<smem>>) -> (i32, i32) {
    %c0_i32 = arith.constant 0 : i32
    %c0_i32_0 = arith.constant 0 : i32
    %c0_i32_1 = arith.constant 0 : i32
    return %c0_i32, %c0_i32_0 : i32, i32
  }
  func.func @transform_2(%arg0: i32, %arg1: memref<1xi32, #tpu.memory_space<smem>>) -> (i32, i32, i32) {
    %c0_i32 = arith.constant 0 : i32
    %c0_i32_0 = arith.constant 0 : i32
    %c0_i32_1 = arith.constant 0 : i32
    return %arg0, %c0_i32, %c0_i32_0 : i32, i32, i32
  }
  func.func @transform_3(%arg0: i32, %arg1: memref<1xi32, #tpu.memory_space<smem>>) -> (i32, i32) {
    %c0_i32 = arith.constant 0 : i32
    %c0_i32_0 = arith.constant 0 : i32
    %c0_i32_1 = arith.constant 0 : i32
    return %c0_i32, %c0_i32_0 : i32, i32
  }
}

</mosaic_0001>

<llo_original>
// kernel: decode_sequence.1
$region0: #{decode_sequence.1}
  #allocation0 [shape = 'u32[]', space=smem, size = 0x4, offset = 0x4, fixed_abs, tag = 'smem constant byte address 0x4 - core index']
  #allocation1 [shape = 'u32[144,128]{1,0:T(1,128)}', space=vmem, size = 0x12000, scoped, tag = 'internal scratch']
  #allocation2 [shape = 'f32[1,32]{1,0:T(1,128)}', space=vmem, size = 0x200, scoped, tag = 'scratch operand']
  #allocation3 [shape = 's32[1]{0}', space=sflag, size = 0x4, scoped, tag = 'scoped memory for decode_sequence.1']
  #allocation4 [shape = 's32[1]{0:T(128)S(6)}', space=smem, size = 0x200, scoped, tag = 'prefetched SMEM operand 0']
  %s0 = inlined_call_operand.<no memory space> [shape: s32[1], index: 0, kind: input, shape index: {}]
  %s1 = inlined_call_operand.hbm [shape: f32[168,128], index: 1, kind: input, shape index: {}]
  %s2 = inlined_call_operand.vmem [shape: f32[1,32], index: 2, kind: input, shape index: {}]
  %s3 = inlined_call_operand.vmem [shape: f32[1,1,128], index: 3, kind: output, shape index: {0}]
  %s4 = inlined_call_operand.hbm [shape: f32[1,32], index: 4, kind: output, shape index: {1}]
  %5 = xla_tuple %s3, %s4
  %s6 = sld [smem:[#allocation0]]
  $region38: #{decode_sequence.1} parent=0
    _
  %s8 = ssub.s32 1, %s6
  %s9 = scalar_select 0, %s8, %s6
  %10 = sst [smem:[#allocation4]] %s0
  $region1: #{decode_sequence.1} parent=0
    #allocation5 [shape = 'u8[86016]{0}', space=vmem, size = 0x15000, scoped, tag = 'input window, operand 1, single buffered']
    #allocation6 [shape = 's32[1]{0}', space=sflag, size = 0x4, scoped, tag = 'scoped memory for decode_sequence.1']
    #allocation7 [shape = 's32[1]{0}', space=sflag, size = 0x4, scoped, tag = 'scoped memory for decode_sequence.1']
    #allocation8 [shape = 'u8[512]{0}', space=vmem, size = 0x400, scoped, tag = 'output window, operand 1, single buffered']
    %11 = vsyncpa [#allocation6], 0
    %12 = vsyncpa [#allocation7], 0
    // Predicated region
    $region2: #{decode_sequence.1} parent=1 // pred_check
      _
    $region3: #{decode_sequence.1} parent=1 // pred_check_branch
      %14 = sbr.rel (0) target = $region5
    $region4: #{decode_sequence.1} parent=1 // pred_region
      %s16 = ssub.s32 2688, 2688
      %17 = vsyncadd [#allocation6], %s16
      %s18 = sshll.u32 [#allocation5], 4
      %s19 = int_to_ptr.vmem [resolvable:$true] %s18
      %24 = dma.hbm_to_vmem [thread:$0]  %s1, 2688, %s19, [#allocation6], 128, 128, 8
    $region5: #{decode_sequence.1} parent=1 // pred_fallthru
      _
    // Predicated region
    $region6: #{decode_sequence.1} parent=1 // pred_check
      _
    $region7: #{decode_sequence.1} parent=1 // pred_check_branch
      %26 = sbr.rel (0) target = $region9
    $region8: #{decode_sequence.1} parent=1 // pred_region
      _
    $region9: #{decode_sequence.1} parent=1 // pred_fallthru
      _
    // Predicated region
    $region10: #{decode_sequence.1} parent=1 // pred_check
      _
    $region11: #{decode_sequence.1} parent=1 // pred_check_branch
      %28 = sbr.rel (0) target = $region13
    $region12: #{decode_sequence.1} parent=1 // pred_region
      %29 = dma.done [#allocation6], 2688
    $region13: #{decode_sequence.1} parent=1 // pred_fallthru
      _
    %p30 = scmp.eq.s32.totalorder 0, 0
    // Predicated region
    $region14: #{decode_sequence.1} parent=1 // pred_check
      %p31 = pneg %p30
    $region15: #{decode_sequence.1} parent=1 // pred_check_branch
      %33 = sbr.rel (%p31) target = $region17
    $region16: #{decode_sequence.1} parent=1 // pred_region
      %v34 = vld [vmem:[%s2] sm:$0x1]
      %vm35 = vcmask 253952
      %36 = vst.msk [vmem:[#allocation2] sm:$0x1] %vm35, %v34
    $region17: #{decode_sequence.1} parent=1 // pred_fallthru
      _
    %s37 = sld [smem:[#allocation4]]
    %v38 = vld [vmem:[#allocation5] sm:$0xff]
    %v39 = vld [vmem:[#allocation5 + $0x8] sm:$0xff]
    %v40 = vld [vmem:[#allocation5 + $0x10] sm:$0xff]
    %v41 = vld [vmem:[#allocation5 + $0x18] sm:$0xff]
    %v42 = vld [vmem:[#allocation5 + $0x20] sm:$0xff]
    %v43 = vld [vmem:[#allocation5 + $0x28] sm:$0xff]
    %v44 = vld [vmem:[#allocation5 + $0x30] sm:$0xff]
    %v45 = vld [vmem:[#allocation5 + $0x38] sm:$0xff]
    %v46 = vld [vmem:[#allocation5 + $0x40] sm:$0xff]
    %v47 = vld [vmem:[#allocation5 + $0x48] sm:$0xff]
    %v48 = vld [vmem:[#allocation5 + $0x50] sm:$0xff]
    %v49 = vld [vmem:[#allocation5 + $0x58] sm:$0xff]
    %v50 = vld [vmem:[#allocation5 + $0x60] sm:$0x1]
    %v51 = vld [vmem:[#allocation5 + $0x61] sm:$0x1]
    %s52 = sadd.s32 %s37, 104
    %s53 = scalar_lea.vmem [#allocation5], %s52
    %v54 = vld [vmem:[%s53] sm:$0x1]
    %v55 = vmax.f32 %v54, 0.0
    %v56 = vld [vmem:[#allocation2] sm:$0x1]
    %vm57 = vcmask 261120
    %v59 = vsel %vm57, %v56, 0
    %61 = vmatprep.subr.mxu0 0.0
    %v62 = vand.u32 %v42, 4294901760
    %63 = vmatpush1.msra.mxu0 %v62
    %64 = vmatprep.subr.mxu0 0.0
    %v65 = vand.u32 %v43, 4294901760
    %66 = vmatpush1.msra.mxu0 %v65
    %67 = vmatprep.subr.mxu0 0.0
    %v68 = vand.u32 %v44, 4294901760
    %69 = vmatpush1.msra.mxu0 %v68
    %70 = vmatprep.subr.mxu0 0.0
    %v71 = vand.u32 %v45, 4294901760
    %72 = vmatpush1.msra.mxu0 %v71
    %73 = vmatprep.subr.mxu0 0.0
    %74 = vmatpush1.msra.mxu0 0.0
    %75 = vmatprep.subr.mxu0 0.0
    %76 = vmatpush1.msra.mxu0 0.0
    %77 = vmatprep.subr.mxu0 0.0
    %78 = vmatpush1.msra.mxu0 0.0
    %79 = vmatprep.subr.mxu0 0.0
    %80 = vmatpush1.msra.mxu0 0.0
    %81 = vmatprep.subr.mxu0 0.0
    %82 = vmatpush1.msra.mxu0 0.0
    %83 = vmatprep.subr.mxu0 0.0
    %84 = vmatpush1.msra.mxu0 0.0
    %85 = vmatprep.subr.mxu0 0.0
    %86 = vmatpush1.msra.mxu0 0.0
    %87 = vmatprep.subr.mxu0 0.0
    %88 = vmatpush1.msra.mxu0 0.0
    %89 = vmatprep.subr.mxu0 0.0
    %90 = vmatpush1.msra.mxu0 0.0
    %91 = vmatprep.subr.mxu0 0.0
    %92 = vmatpush1.msra.mxu0 0.0
    %93 = vmatprep.subr.mxu0 0.0
    %94 = vmatpush1.msra.mxu0 0.0
    %95 = vmatprep.subr.mxu0 0.0
    %96 = vmatpush1.msra.mxu0 0.0
    %97 = vmatprep.subr.mxu0 0.0
    %98 = vmatpush1.msra.mxu0 0.0
    %99 = vmatprep.subr.mxu0 0.0
    %100 = vmatpush1.msra.mxu0 0.0
    %101 = vmatprep.subr.mxu0 0.0
    %102 = vmatpush1.msra.mxu0 0.0
    %103 = vmatprep.subr.mxu0 0.0
    %104 = vmatpush1.msra.mxu0 0.0
    %105 = vmatprep.subr.mxu0 0.0
    %106 = vmatpush1.msra.mxu0 0.0
    %107 = vmatprep.subr.mxu0 0.0
    %108 = vmatpush1.msra.mxu0 0.0
    %109 = vmatprep.subr.mxu0 0.0
    %110 = vmatpush1.msra.mxu0 0.0
    %111 = vmatprep.subr.mxu0 0.0
    %112 = vmatpush1.msra.mxu0 0.0
    %113 = vmatprep.subr.mxu0 0.0
    %114 = vmatpush1.msra.mxu0 0.0
    %115 = vmatprep.subr.mxu0 0.0
    %116 = vmatpush1.msra.mxu0 0.0
    %117 = vmatprep.subr.mxu0 0.0
    %118 = vmatpush1.msra.mxu0 0.0
    %119 = vmatprep.subr.mxu0 0.0
    %120 = vmatpush1.msra.mxu0 0.0
    %121 = vmatprep.subr.mxu0 0.0
    %122 = vmatpush1.msra.mxu0 0.0
    %123 = vmatprep.subr.mxu0 0.0
    %124 = vmatpush1.msra.mxu0 0.0
    %125 = vmatprep.subr.mxu0 0.0
    %126 = vmatpush1.msra.mxu0 0.0
    %127 = vmatprep.subr.mxu0 0.0
    %128 = vmatpush1.msra.mxu0 0.0
    %129 = vmatprep.mubr.f32.mxu0 0.0
    %v130 = vand.u32 %v59, 4294901760
    %v131 = vsub.f32 %v59, %v130
    %v132 = vand.u32 %v131, 4294901760
    %v133 = vsub.f32 %v131, %v132
    %v134 = vand.u32 %v133, 4294901760
    %135 = vmatmul.mubr.f32.gmra.mrb[0].mxu0 %v134
    %v136 = vpop.f32.mrb[0].mxu0
    %v137 = vadd.f32 0.0, %v136
    %v138 = vpop.f32.mrb[0].mxu0
    %139 = vdwg.mxu0
    %140 = vmatprep.subr.mxu0 0.0
    %v141 = vand.u32 %v42, 4294901760
    %v142 = vsub.f32 %v42, %v141
    %v143 = vand.u32 %v142, 4294901760
    %v144 = vsub.f32 %v142, %v143
    %v145 = vand.u32 %v144, 4294901760
    %146 = vmatpush1.msra.mxu0 %v145
    %147 = vmatprep.subr.mxu0 0.0
    %v148 = vand.u32 %v43, 4294901760
    %v149 = vsub.f32 %v43, %v148
    %v150 = vand.u32 %v149, 4294901760
    %v151 = vsub.f32 %v149, %v150
    %v152 = vand.u32 %v151, 4294901760
    %153 = vmatpush1.msra.mxu0 %v152
    %154 = vmatprep.subr.mxu0 0.0
    %v155 = vand.u32 %v44, 4294901760
    %v156 = vsub.f32 %v44, %v155
    %v157 = vand.u32 %v156, 4294901760
    %v158 = vsub.f32 %v156, %v157
    %v159 = vand.u32 %v158, 4294901760
    %160 = vmatpush1.msra.mxu0 %v159
    %161 = vmatprep.subr.mxu0 0.0
    %v162 = vand.u32 %v45, 4294901760
    %v163 = vsub.f32 %v45, %v162
    %v164 = vand.u32 %v163, 4294901760
    %v165 = vsub.f32 %v163, %v164
    %v166 = vand.u32 %v165, 4294901760
    %167 = vmatpush1.msra.mxu0 %v166
    %168 = vmatprep.subr.mxu0 0.0
    %169 = vmatpush1.msra.mxu0 0.0
    %170 = vmatprep.subr.mxu0 0.0
    %171 = vmatpush1.msra.mxu0 0.0
    %172 = vmatprep.subr.mxu0 0.0
    %173 = vmatpush1.msra.mxu0 0.0
    %174 = vmatprep.subr.mxu0 0.0
    %175 = vmatpush1.msra.mxu0 0.0
    %176 = vmatprep.subr.mxu0 0.0
    %177 = vmatpush1.msra.mxu0 0.0
    %178 = vmatprep.subr.mxu0 0.0
    %179 = vmatpush1.msra.mxu0 0.0
    %180 = vmatprep.subr.mxu0 0.0
    %181 = vmatpush1.msra.mxu0 0.0
    %182 = vmatprep.subr.mxu0 0.0
    %183 = vmatpush1.msra.mxu0 0.0
    %184 = vmatprep.subr.mxu0 0.0
    %185 = vmatpush1.msra.mxu0 0.0
    %186 = vmatprep.subr.mxu0 0.0
    %187 = vmatpush1.msra.mxu0 0.0
    %188 = vmatprep.subr.mxu0 0.0
    %189 = vmatpush1.msra.mxu0 0.0
    %190 = vmatprep.subr.mxu0 0.0
    %191 = vmatpush1.msra.mxu0 0.0
    %192 = vmatprep.subr.mxu0 0.0
    %193 = vmatpush1.msra.mxu0 0.0
    %194 = vmatprep.subr.mxu0 0.0
    %195 = vmatpush1.msra.mxu0 0.0
    %196 = vmatprep.subr.mxu0 0.0
    %197 = vmatpush1.msra.mxu0 0.0
    %198 = vmatprep.subr.mxu0 0.0
    %199 = vmatpush1.msra.mxu0 0.0
    %200 = vmatprep.subr.mxu0 0.0
    %201 = vmatpush1.msra.mxu0 0.0
    %202 = vmatprep.subr.mxu0 0.0
    %203 = vmatpush1.msra.mxu0 0.0
    %204 = vmatprep.subr.mxu0 0.0
    %205 = vmatpush1.msra.mxu0 0.0
    %206 = vmatprep.subr.mxu0 0.0
    %207 = vmatpush1.msra.mxu0 0.0
    %208 = vmatprep.subr.mxu0 0.0
    %209 = vmatpush1.msra.mxu0 0.0
    %210 = vmatprep.subr.mxu0 0.0
    %211 = vmatpush1.msra.mxu0 0.0
    %212 = vmatprep.subr.mxu0 0.0
    %213 = vmatpush1.msra.mxu0 0.0
    %214 = vmatprep.subr.mxu0 0.0
    %215 = vmatpush1.msra.mxu0 0.0
    %216 = vmatprep.subr.mxu0 0.0
    %217 = vmatpush1.msra.mxu0 0.0
    %218 = vmatprep.subr.mxu0 0.0
    %219 = vmatpush1.msra.mxu0 0.0
    %220 = vmatprep.subr.mxu0 0.0
    %221 = vmatpush1.msra.mxu0 0.0
    %222 = vmatprep.subr.mxu0 0.0
    %223 = vmatpush1.msra.mxu0 0.0
    %224 = vmatprep.mubr.f32.mxu0 0.0
    %v225 = vand.u32 %v59, 4294901760
    %226 = vmatmul.mubr.f32.gmra.mrb[0].mxu0 %v225
    %v227 = vpop.f32.mrb[0].mxu0
    %v228 = vadd.f32 %v137, %v227
    %v229 = vpop.f32.mrb[0].mxu0
    %230 = vdwg.mxu0
    %231 = vmatprep.subr.mxu0 0.0
    %v232 = vand.u32 %v42, 4294901760
    %v233 = vsub.f32 %v42, %v232
    %234 = vmatpush1.msra.mxu0 %v233
    %235 = vmatprep.subr.mxu0 0.0
    %v236 = vand.u32 %v43, 4294901760
    %v237 = vsub.f32 %v43, %v236
    %238 = vmatpush1.msra.mxu0 %v237
    %239 = vmatprep.subr.mxu0 0.0
    %v240 = vand.u32 %v44, 4294901760
    %v241 = vsub.f32 %v44, %v240
    %242 = vmatpush1.msra.mxu0 %v241
    %243 = vmatprep.subr.mxu0 0.0
    %v244 = vand.u32 %v45, 4294901760
    %v245 = vsub.f32 %v45, %v244
    %246 = vmatpush1.msra.mxu0 %v245
    %247 = vmatprep.subr.mxu0 0.0
    %248 = vmatpush1.msra.mxu0 0.0
    %249 = vmatprep.subr.mxu0 0.0
    %250 = vmatpush1.msra.mxu0 0.0
    %251 = vmatprep.subr.mxu0 0.0
    %252 = vmatpush1.msra.mxu0 0.0
    %253 = vmatprep.subr.mxu0 0.0
    %254 = vmatpush1.msra.mxu0 0.0
    %255 = vmatprep.subr.mxu0 0.0
    %256 = vmatpush1.msra.mxu0 0.0
    %257 = vmatprep.subr.mxu0 0.0
    %258 = vmatpush1.msra.mxu0 0.0
    %259 = vmatprep.subr.mxu0 0.0
    %260 = vmatpush1.msra.mxu0 0.0
    %261 = vmatprep.subr.mxu0 0.0
    %262 = vmatpush1.msra.mxu0 0.0
    %263 = vmatprep.subr.mxu0 0.0
    %264 = vmatpush1.msra.mxu0 0.0
    %265 = vmatprep.subr.mxu0 0.0
    %266 = vmatpush1.msra.mxu0 0.0
    %267 = vmatprep.subr.mxu0 0.0
    %268 = vmatpush1.msra.mxu0 0.0
    %269 = vmatprep.subr.mxu0 0.0
    %270 = vmatpush1.msra.mxu0 0.0
    %271 = vmatprep.subr.mxu0 0.0
    %272 = vmatpush1.msra.mxu0 0.0
    %273 = vmatprep.subr.mxu0 0.0
    %274 = vmatpush1.msra.mxu0 0.0
    %275 = vmatprep.subr.mxu0 0.0
    %276 = vmatpush1.msra.mxu0 0.0
    %277 = vmatprep.subr.mxu0 0.0
    %278 = vmatpush1.msra.mxu0 0.0
    %279 = vmatprep.subr.mxu0 0.0
    %280 = vmatpush1.msra.mxu0 0.0
    %281 = vmatprep.subr.mxu0 0.0
    %282 = vmatpush1.msra.mxu0 0.0
    %283 = vmatprep.subr.mxu0 0.0
    %284 = vmatpush1.msra.mxu0 0.0
    %285 = vmatprep.subr.mxu0 0.0
    %286 = vmatpush1.msra.mxu0 0.0
    %287 = vmatprep.subr.mxu0 0.0
    %288 = vmatpush1.msra.mxu0 0.0
    %289 = vmatprep.subr.mxu0 0.0
    %290 = vmatpush1.msra.mxu0 0.0
    %291 = vmatprep.subr.mxu0 0.0
    %292 = vmatpush1.msra.mxu0 0.0
    %293 = vmatprep.subr.mxu0 0.0
    %294 = vmatpush1.msra.mxu0 0.0
    %295 = vmatprep.subr.mxu0 0.0
    %296 = vmatpush1.msra.mxu0 0.0
    %297 = vmatprep.subr.mxu0 0.0
    %298 = vmatpush1.msra.mxu0 0.0
    %299 = vmatprep.subr.mxu0 0.0
    %300 = vmatpush1.msra.mxu0 0.0
    %301 = vmatprep.subr.mxu0 0.0
    %302 = vmatpush1.msra.mxu0 0.0
    %303 = vmatprep.mubr.f32.mxu0 0.0
    %v304 = vand.u32 %v59, 4294901760
    %v305 = vsub.f32 %v59, %v304
    %306 = vmatmul.mubr.f32.gmra.mrb[0].mxu0 %v305
    %v307 = vpop.f32.mrb[0].mxu0
    %v308 = vadd.f32 %v228, %v307
    %v309 = vpop.f32.mrb[0].mxu0
    %310 = vdwg.mxu0
    %311 = vmatprep.subr.mxu0 0.0
    %v312 = vand.u32 %v42, 4294901760
    %313 = vmatpush1.msra.mxu0 %v312
    %314 = vmatprep.subr.mxu0 0.0
    %v315 = vand.u32 %v43, 4294901760
    %316 = vmatpush1.msra.mxu0 %v315
    %317 = vmatprep.subr.mxu0 0.0
    %v318 = vand.u32 %v44, 4294901760
    %319 = vmatpush1.msra.mxu0 %v318
    %320 = vmatprep.subr.mxu0 0.0
    %v321 = vand.u32 %v45, 4294901760
    %322 = vmatpush1.msra.mxu0 %v321
    %323 = vmatprep.subr.mxu0 0.0
    %324 = vmatpush1.msra.mxu0 0.0
    %325 = vmatprep.subr.mxu0 0.0
    %326 = vmatpush1.msra.mxu0 0.0
    %327 = vmatprep.subr.mxu0 0.0
    %328 = vmatpush1.msra.mxu0 0.0
    %329 = vmatprep.subr.mxu0 0.0
    %330 = vmatpush1.msra.mxu0 0.0
    %331 = vmatprep.subr.mxu0 0.0
    %332 = vmatpush1.msra.mxu0 0.0
    %333 = vmatprep.subr.mxu0 0.0
    %334 = vmatpush1.msra.mxu0 0.0
    %335 = vmatprep.subr.mxu0 0.0
    %336 = vmatpush1.msra.mxu0 0.0
    %337 = vmatprep.subr.mxu0 0.0
    %338 = vmatpush1.msra.mxu0 0.0
    %339 = vmatprep.subr.mxu0 0.0
    %340 = vmatpush1.msra.mxu0 0.0
    %341 = vmatprep.subr.mxu0 0.0
    %342 = vmatpush1.msra.mxu0 0.0
    %343 = vmatprep.subr.mxu0 0.0
    %344 = vmatpush1.msra.mxu0 0.0
    %345 = vmatprep.subr.mxu0 0.0
    %346 = vmatpush1.msra.mxu0 0.0
    %347 = vmatprep.subr.mxu0 0.0
    %348 = vmatpush1.msra.mxu0 0.0
    %349 = vmatprep.subr.mxu0 0.0
    %350 = vmatpush1.msra.mxu0 0.0
    %351 = vmatprep.subr.mxu0 0.0
    %352 = vmatpush1.msra.mxu0 0.0
    %353 = vmatprep.subr.mxu0 0.0
    %354 = vmatpush1.msra.mxu0 0.0
    %355 = vmatprep.subr.mxu0 0.0
    %356 = vmatpush1.msra.mxu0 0.0
    %357 = vmatprep.subr.mxu0 0.0
    %358 = vmatpush1.msra.mxu0 0.0
    %359 = vmatprep.subr.mxu0 0.0
    %360 = vmatpush1.msra.mxu0 0.0
    %361 = vmatprep.subr.mxu0 0.0
    %362 = vmatpush1.msra.mxu0 0.0
    %363 = vmatprep.subr.mxu0 0.0
    %364 = vmatpush1.msra.mxu0 0.0
    %365 = vmatprep.subr.mxu0 0.0
    %366 = vmatpush1.msra.mxu0 0.0
    %367 = vmatprep.subr.mxu0 0.0
    %368 = vmatpush1.msra.mxu0 0.0
    %369 = vmatprep.subr.mxu0 0.0
    %370 = vmatpush1.msra.mxu0 0.0
    %371 = vmatprep.subr.mxu0 0.0
    %372 = vmatpush1.msra.mxu0 0.0
    %373 = vmatprep.subr.mxu0 0.0
    %374 = vmatpush1.msra.mxu0 0.0
    %375 = vmatprep.subr.mxu0 0.0
    %376 = vmatpush1.msra.mxu0 0.0
    %377 = vmatprep.subr.mxu0 0.0
    %378 = vmatpush1.msra.mxu0 0.0
    %379 = vmatprep.mubr.f32.mxu0 0.0
    %v380 = vand.u32 %v59, 4294901760
    %v381 = vsub.f32 %v59, %v380
    %v382 = vand.u32 %v381, 4294901760
    %383 = vmatmul.mubr.f32.gmra.mrb[0].mxu0 %v382
    %v384 = vpop.f32.mrb[0].mxu0
    %v385 = vadd.f32 %v308, %v384
    %v386 = vpop.f32.mrb[0].mxu0
    %387 = vdwg.mxu0
    %388 = vmatprep.subr.mxu0 0.0
    %v389 = vand.u32 %v42, 4294901760
    %v390 = vsub.f32 %v42, %v389
    %v391 = vand.u32 %v390, 4294901760
    %392 = vmatpush1.msra.mxu0 %v391
    %393 = vmatprep.subr.mxu0 0.0
    %v394 = vand.u32 %v43, 4294901760
    %v395 = vsub.f32 %v43, %v394
    %v396 = vand.u32 %v395, 4294901760
    %397 = vmatpush1.msra.mxu0 %v396
    %398 = vmatprep.subr.mxu0 0.0
    %v399 = vand.u32 %v44, 4294901760
    %v400 = vsub.f32 %v44, %v399
    %v401 = vand.u32 %v400, 4294901760
    %402 = vmatpush1.msra.mxu0 %v401
    %403 = vmatprep.subr.mxu0 0.0
    %v404 = vand.u32 %v45, 4294901760
    %v405 = vsub.f32 %v45, %v404
    %v406 = vand.u32 %v405, 4294901760
    %407 = vmatpush1.msra.mxu0 %v406
    %408 = vmatprep.subr.mxu0 0.0
    %409 = vmatpush1.msra.mxu0 0.0
    %410 = vmatprep.subr.mxu0 0.0
    %411 = vmatpush1.msra.mxu0 0.0
    %412 = vmatprep.subr.mxu0 0.0
    %413 = vmatpush1.msra.mxu0 0.0
    %414 = vmatprep.subr.mxu0 0.0
    %415 = vmatpush1.msra.mxu0 0.0
    %416 = vmatprep.subr.mxu0 0.0
    %417 = vmatpush1.msra.mxu0 0.0
    %418 = vmatprep.subr.mxu0 0.0
    %419 = vmatpush1.msra.mxu0 0.0
    %420 = vmatprep.subr.mxu0 0.0
    %421 = vmatpush1.msra.mxu0 0.0
    %422 = vmatprep.subr.mxu0 0.0
    %423 = vmatpush1.msra.mxu0 0.0
    %424 = vmatprep.subr.mxu0 0.0
    %425 = vmatpush1.msra.mxu0 0.0
    %426 = vmatprep.subr.mxu0 0.0
    %427 = vmatpush1.msra.mxu0 0.0
    %428 = vmatprep.subr.mxu0 0.0
    %429 = vmatpush1.msra.mxu0 0.0
    %430 = vmatprep.subr.mxu0 0.0
    %431 = vmatpush1.msra.mxu0 0.0
    %432 = vmatprep.subr.mxu0 0.0
    %433 = vmatpush1.msra.mxu0 0.0
    %434 = vmatprep.subr.mxu0 0.0
    %435 = vmatpush1.msra.mxu0 0.0
    %436 = vmatprep.subr.mxu0 0.0
    %437 = vmatpush1.msra.mxu0 0.0
    %438 = vmatprep.subr.mxu0 0.0
    %439 = vmatpush1.msra.mxu0 0.0
    %440 = vmatprep.subr.mxu0 0.0
    %441 = vmatpush1.msra.mxu0 0.0
    %442 = vmatprep.subr.mxu0 0.0
    %443 = vmatpush1.msra.mxu0 0.0
    %444 = vmatprep.subr.mxu0 0.0
    %445 = vmatpush1.msra.mxu0 0.0
    %446 = vmatprep.subr.mxu0 0.0
    %447 = vmatpush1.msra.mxu0 0.0
    %448 = vmatprep.subr.mxu0 0.0
    %449 = vmatpush1.msra.mxu0 0.0
    %450 = vmatprep.subr.mxu0 0.0
    %451 = vmatpush1.msra.mxu0 0.0
    %452 = vmatprep.subr.mxu0 0.0
    %453 = vmatpush1.msra.mxu0 0.0
    %454 = vmatprep.subr.mxu0 0.0
    %455 = vmatpush1.msra.mxu0 0.0
    %456 = vmatprep.subr.mxu0 0.0
    %457 = vmatpush1.msra.mxu0 0.0
    %458 = vmatprep.subr.mxu0 0.0
    %459 = vmatpush1.msra.mxu0 0.0
    %460 = vmatprep.subr.mxu0 0.0
    %461 = vmatpush1.msra.mxu0 0.0
    %462 = vmatprep.subr.mxu0 0.0
    %463 = vmatpush1.msra.mxu0 0.0
    %464 = vmatprep.mubr.f32.mxu0 0.0
    %v465 = vand.u32 %v59, 4294901760
    %466 = vmatmul.mubr.f32.gmra.mrb[0].mxu0 %v465
    %v467 = vpop.f32.mrb[0].mxu0
    %v468 = vadd.f32 %v385, %v467
    %v469 = vpop.f32.mrb[0].mxu0
    %470 = vdwg.mxu0
    %471 = vmatprep.subr.mxu0 0.0
    %v472 = vand.u32 %v42, 4294901760
    %473 = vmatpush1.msra.mxu0 %v472
    %474 = vmatprep.subr.mxu0 0.0
    %v475 = vand.u32 %v43, 4294901760
    %476 = vmatpush1.msra.mxu0 %v475
    %477 = vmatprep.subr.mxu0 0.0
    %v478 = vand.u32 %v44, 4294901760
    %479 = vmatpush1.msra.mxu0 %v478
    %480 = vmatprep.subr.mxu0 0.0
    %v481 = vand.u32 %v45, 4294901760
    %482 = vmatpush1.msra.mxu0 %v481
    %483 = vmatprep.subr.mxu0 0.0
    %484 = vmatpush1.msra.mxu0 0.0
    %485 = vmatprep.subr.mxu0 0.0
    %486 = vmatpush1.msra.mxu0 0.0
    %487 = vmatprep.subr.mxu0 0.0
    %488 = vmatpush1.msra.mxu0 0.0
    %489 = vmatprep.subr.mxu0 0.0
    %490 = vmatpush1.msra.mxu0 0.0
    %491 = vmatprep.subr.mxu0 0.0
    %492 = vmatpush1.msra.mxu0 0.0
    %493 = vmatprep.subr.mxu0 0.0
    %494 = vmatpush1.msra.mxu0 0.0
    %495 = vmatprep.subr.mxu0 0.0
    %496 = vmatpush1.msra.mxu0 0.0
    %497 = vmatprep.subr.mxu0 0.0
    %498 = vmatpush1.msra.mxu0 0.0
    %499 = vmatprep.subr.mxu0 0.0
    %500 = vmatpush1.msra.mxu0 0.0
    %501 = vmatprep.subr.mxu0 0.0
    %502 = vmatpush1.msra.mxu0 0.0
    %503 = vmatprep.subr.mxu0 0.0
    %504 = vmatpush1.msra.mxu0 0.0
    %505 = vmatprep.subr.mxu0 0.0
    %506 = vmatpush1.msra.mxu0 0.0
    %507 = vmatprep.subr.mxu0 0.0
    %508 = vmatpush1.msra.mxu0 0.0
    %509 = vmatprep.subr.mxu0 0.0
    %510 = vmatpush1.msra.mxu0 0.0
    %511 = vmatprep.subr.mxu0 0.0
    %512 = vmatpush1.msra.mxu0 0.0
    %513 = vmatprep.subr.mxu0 0.0
    %514 = vmatpush1.msra.mxu0 0.0
    %515 = vmatprep.subr.mxu0 0.0
    %516 = vmatpush1.msra.mxu0 0.0
    %517 = vmatprep.subr.mxu0 0.0
    %518 = vmatpush1.msra.mxu0 0.0
    %519 = vmatprep.subr.mxu0 0.0
    %520 = vmatpush1.msra.mxu0 0.0
    %521 = vmatprep.subr.mxu0 0.0
    %522 = vmatpush1.msra.mxu0 0.0
    %523 = vmatprep.subr.mxu0 0.0
    %524 = vmatpush1.msra.mxu0 0.0
    %525 = vmatprep.subr.mxu0 0.0
    %526 = vmatpush1.msra.mxu0 0.0
    %527 = vmatprep.subr.mxu0 0.0
    %528 = vmatpush1.msra.mxu0 0.0
    %529 = vmatprep.subr.mxu0 0.0
    %530 = vmatpush1.msra.mxu0 0.0
    %531 = vmatprep.subr.mxu0 0.0
    %532 = vmatpush1.msra.mxu0 0.0
    %533 = vmatprep.subr.mxu0 0.0
    %534 = vmatpush1.msra.mxu0 0.0
    %535 = vmatprep.subr.mxu0 0.0
    %536 = vmatpush1.msra.mxu0 0.0
    %537 = vmatprep.subr.mxu0 0.0
    %538 = vmatpush1.msra.mxu0 0.0
    %539 = vmatprep.mubr.f32.mxu0 0.0
    %v540 = vand.u32 %v59, 4294901760
    %541 = vmatmul.mubr.f32.gmra.mrb[0].mxu0 %v540
    %v542 = vpop.f32.mrb[0].mxu0
    %v543 = vadd.f32 %v468, %v542
    %v544 = vpop.f32.mrb[0].mxu0
    %545 = vdwg.mxu0
    %v547 = vsel %vm57, %v55, 0
    %549 = vmatprep.subr.mxu0 0.0
    %v550 = vand.u32 %v38, 4294901760
    %551 = vmatpush1.msra.mxu0 %v550
    %552 = vmatprep.subr.mxu0 0.0
    %v553 = vand.u32 %v39, 4294901760
    %554 = vmatpush1.msra.mxu0 %v553
    %555 = vmatprep.subr.mxu0 0.0
    %v556 = vand.u32 %v40, 4294901760
    %557 = vmatpush1.msra.mxu0 %v556
    %558 = vmatprep.subr.mxu0 0.0
    %v559 = vand.u32 %v41, 4294901760
    %560 = vmatpush1.msra.mxu0 %v559
    %561 = vmatprep.subr.mxu0 0.0
    %562 = vmatpush1.msra.mxu0 0.0
    %563 = vmatprep.subr.mxu0 0.0
    %564 = vmatpush1.msra.mxu0 0.0
    %565 = vmatprep.subr.mxu0 0.0
    %566 = vmatpush1.msra.mxu0 0.0
    %567 = vmatprep.subr.mxu0 0.0
    %568 = vmatpush1.msra.mxu0 0.0
    %569 = vmatprep.subr.mxu0 0.0
    %570 = vmatpush1.msra.mxu0 0.0
    %571 = vmatprep.subr.mxu0 0.0
    %572 = vmatpush1.msra.mxu0 0.0
    %573 = vmatprep.subr.mxu0 0.0
    %574 = vmatpush1.msra.mxu0 0.0
    %575 = vmatprep.subr.mxu0 0.0
    %576 = vmatpush1.msra.mxu0 0.0
    %577 = vmatprep.subr.mxu0 0.0
    %578 = vmatpush1.msra.mxu0 0.0
    %579 = vmatprep.subr.mxu0 0.0
    %580 = vmatpush1.msra.mxu0 0.0
    %581 = vmatprep.subr.mxu0 0.0
    %582 = vmatpush1.msra.mxu0 0.0
    %583 = vmatprep.subr.mxu0 0.0
    %584 = vmatpush1.msra.mxu0 0.0
    %585 = vmatprep.subr.mxu0 0.0
    %586 = vmatpush1.msra.mxu0 0.0
    %587 = vmatprep.subr.mxu0 0.0
    %588 = vmatpush1.msra.mxu0 0.0
    %589 = vmatprep.subr.mxu0 0.0
    %590 = vmatpush1.msra.mxu0 0.0
    %591 = vmatprep.subr.mxu0 0.0
    %592 = vmatpush1.msra.mxu0 0.0
    %593 = vmatprep.subr.mxu0 0.0
    %594 = vmatpush1.msra.mxu0 0.0
    %595 = vmatprep.subr.mxu0 0.0
    %596 = vmatpush1.msra.mxu0 0.0
    %597 = vmatprep.subr.mxu0 0.0
    %598 = vmatpush1.msra.mxu0 0.0
    %599 = vmatprep.subr.mxu0 0.0
    %600 = vmatpush1.msra.mxu0 0.0
    %601 = vmatprep.subr.mxu0 0.0
    %602 = vmatpush1.msra.mxu0 0.0
    %603 = vmatprep.subr.mxu0 0.0
    %604 = vmatpush1.msra.mxu0 0.0
    %605 = vmatprep.subr.mxu0 0.0
    %606 = vmatpush1.msra.mxu0 0.0
    %607 = vmatprep.subr.mxu0 0.0
    %608 = vmatpush1.msra.mxu0 0.0
    %609 = vmatprep.subr.mxu0 0.0
    %610 = vmatpush1.msra.mxu0 0.0
    %611 = vmatprep.subr.mxu0 0.0
    %612 = vmatpush1.msra.mxu0 0.0
    %613 = vmatprep.subr.mxu0 0.0
    %614 = vmatpush1.msra.mxu0 0.0
    %615 = vmatprep.subr.mxu0 0.0
    %616 = vmatpush1.msra.mxu0 0.0
    %617 = vmatprep.mubr.f32.mxu0 0.0
    %v618 = vand.u32 %v547, 4294901760
    %v619 = vsub.f32 %v547, %v618
    %v620 = vand.u32 %v619, 4294901760
    %v621 = vsub.f32 %v619, %v620
    %v622 = vand.u32 %v621, 4294901760
    %623 = vmatmul.mubr.f32.gmra.mrb[0].mxu0 %v622
    %v624 = vpop.f32.mrb[0].mxu0
    %v625 = vadd.f32 %v543, %v624
    %v626 = vpop.f32.mrb[0].mxu0
    %627 = vdwg.mxu0
    %628 = vmatprep.subr.mxu0 0.0
    %v629 = vand.u32 %v38, 4294901760
    %v630 = vsub.f32 %v38, %v629
    %v631 = vand.u32 %v630, 4294901760
    %v632 = vsub.f32 %v630, %v631
    %v633 = vand.u32 %v632, 4294901760
    %634 = vmatpush1.msra.mxu0 %v633
    %635 = vmatprep.subr.mxu0 0.0
    %v636 = vand.u32 %v39, 4294901760
    %v637 = vsub.f32 %v39, %v636
    %v638 = vand.u32 %v637, 4294901760
    %v639 = vsub.f32 %v637, %v638
    %v640 = vand.u32 %v639, 4294901760
    %641 = vmatpush1.msra.mxu0 %v640
    %642 = vmatprep.subr.mxu0 0.0
    %v643 = vand.u32 %v40, 4294901760
    %v644 = vsub.f32 %v40, %v643
    %v645 = vand.u32 %v644, 4294901760
    %v646 = vsub.f32 %v644, %v645
    %v647 = vand.u32 %v646, 4294901760
    %648 = vmatpush1.msra.mxu0 %v647
    %649 = vmatprep.subr.mxu0 0.0
    %v650 = vand.u32 %v41, 4294901760
    %v651 = vsub.f32 %v41, %v650
    %v652 = vand.u32 %v651, 4294901760
    %v653 = vsub.f32 %v651, %v652
    %v654 = vand.u32 %v653, 4294901760
    %655 = vmatpush1.msra.mxu0 %v654
    %656 = vmatprep.subr.mxu0 0.0
    %657 = vmatpush1.msra.mxu0 0.0
    %658 = vmatprep.subr.mxu0 0.0
    %659 = vmatpush1.msra.mxu0 0.0
    %660 = vmatprep.subr.mxu0 0.0
    %661 = vmatpush1.msra.mxu0 0.0
    %662 = vmatprep.subr.mxu0 0.0
    %663 = vmatpush1.msra.mxu0 0.0
    %664 = vmatprep.subr.mxu0 0.0
    %665 = vmatpush1.msra.mxu0 0.0
    %666 = vmatprep.subr.mxu0 0.0
    %667 = vmatpush1.msra.mxu0 0.0
    %668 = vmatprep.subr.mxu0 0.0
    %669 = vmatpush1.msra.mxu0 0.0
    %670 = vmatprep.subr.mxu0 0.0
    %671 = vmatpush1.msra.mxu0 0.0
    %672 = vmatprep.subr.mxu0 0.0
    %673 = vmatpush1.msra.mxu0 0.0
    %674 = vmatprep.subr.mxu0 0.0
    %675 = vmatpush1.msra.mxu0 0.0
    %676 = vmatprep.subr.mxu0 0.0
    %677 = vmatpush1.msra.mxu0 0.0
    %678 = vmatprep.subr.mxu0 0.0
    %679 = vmatpush1.msra.mxu0 0.0
    %680 = vmatprep.subr.mxu0 0.0
    %681 = vmatpush1.msra.mxu0 0.0
    %682 = vmatprep.subr.mxu0 0.0
    %683 = vmatpush1.msra.mxu0 0.0
    %684 = vmatprep.subr.mxu0 0.0
    %685 = vmatpush1.msra.mxu0 0.0
    %686 = vmatprep.subr.mxu0 0.0
    %687 = vmatpush1.msra.mxu0 0.0
    %688 = vmatprep.subr.mxu0 0.0
    %689 = vmatpush1.msra.mxu0 0.0
    %690 = vmatprep.subr.mxu0 0.0
    %691 = vmatpush1.msra.mxu0 0.0
    %692 = vmatprep.subr.mxu0 0.0
    %693 = vmatpush1.msra.mxu0 0.0
    %694 = vmatprep.subr.mxu0 0.0
    %695 = vmatpush1.msra.mxu0 0.0
    %696 = vmatprep.subr.mxu0 0.0
    %697 = vmatpush1.msra.mxu0 0.0
    %698 = vmatprep.subr.mxu0 0.0
    %699 = vmatpush1.msra.mxu0 0.0
    %700 = vmatprep.subr.mxu0 0.0
    %701 = vmatpush1.msra.mxu0 0.0
    %702 = vmatprep.subr.mxu0 0.0
    %703 = vmatpush1.msra.mxu0 0.0
    %704 = vmatprep.subr.mxu0 0.0
    %705 = vmatpush1.msra.mxu0 0.0
    %706 = vmatprep.subr.mxu0 0.0
    %707 = vmatpush1.msra.mxu0 0.0
    %708 = vmatprep.subr.mxu0 0.0
    %709 = vmatpush1.msra.mxu0 0.0
    %710 = vmatprep.subr.mxu0 0.0
    %711 = vmatpush1.msra.mxu0 0.0
    %712 = vmatprep.mubr.f32.mxu0 0.0
    %v713 = vand.u32 %v547, 4294901760
    %714 = vmatmul.mubr.f32.gmra.mrb[0].mxu0 %v713
    %v715 = vpop.f32.mrb[0].mxu0
    %v716 = vadd.f32 %v625, %v715
    %v717 = vpop.f32.mrb[0].mxu0
    %718 = vdwg.mxu0
    %719 = vmatprep.subr.mxu0 0.0
    %v720 = vand.u32 %v38, 4294901760
    %v721 = vsub.f32 %v38, %v720
    %722 = vmatpush1.msra.mxu0 %v721
    %723 = vmatprep.subr.mxu0 0.0
    %v724 = vand.u32 %v39, 4294901760
    %v725 = vsub.f32 %v39, %v724
    %726 = vmatpush1.msra.mxu0 %v725
    %727 = vmatprep.subr.mxu0 0.0
    %v728 = vand.u32 %v40, 4294901760
    %v729 = vsub.f32 %v40, %v728
    %730 = vmatpush1.msra.mxu0 %v729
    %731 = vmatprep.subr.mxu0 0.0
    %v732 = vand.u32 %v41, 4294901760
    %v733 = vsub.f32 %v41, %v732
    %734 = vmatpush1.msra.mxu0 %v733
    %735 = vmatprep.subr.mxu0 0.0
    %736 = vmatpush1.msra.mxu0 0.0
    %737 = vmatprep.subr.mxu0 0.0
    %738 = vmatpush1.msra.mxu0 0.0
    %739 = vmatprep.subr.mxu0 0.0
    %740 = vmatpush1.msra.mxu0 0.0
    %741 = vmatprep.subr.mxu0 0.0
    %742 = vmatpush1.msra.mxu0 0.0
    %743 = vmatprep.subr.mxu0 0.0
    %744 = vmatpush1.msra.mxu0 0.0
    %745 = vmatprep.subr.mxu0 0.0
    %746 = vmatpush1.msra.mxu0 0.0
    %747 = vmatprep.subr.mxu0 0.0
    %748 = vmatpush1.msra.mxu0 0.0
    %749 = vmatprep.subr.mxu0 0.0
    %750 = vmatpush1.msra.mxu0 0.0
    %751 = vmatprep.subr.mxu0 0.0
    %752 = vmatpush1.msra.mxu0 0.0
    %753 = vmatprep.subr.mxu0 0.0
    %754 = vmatpush1.msra.mxu0 0.0
    %755 = vmatprep.subr.mxu0 0.0
    %756 = vmatpush1.msra.mxu0 0.0
    %757 = vmatprep.subr.mxu0 0.0
    %758 = vmatpush1.msra.mxu0 0.0
    %759 = vmatprep.subr.mxu0 0.0
    %760 = vmatpush1.msra.mxu0 0.0
    %761 = vmatprep.subr.mxu0 0.0
    %762 = vmatpush1.msra.mxu0 0.0
    %763 = vmatprep.subr.mxu0 0.0
    %764 = vmatpush1.msra.mxu0 0.0
    %765 = vmatprep.subr.mxu0 0.0
    %766 = vmatpush1.msra.mxu0 0.0
    %767 = vmatprep.subr.mxu0 0.0
    %768 = vmatpush1.msra.mxu0 0.0
    %769 = vmatprep.subr.mxu0 0.0
    %770 = vmatpush1.msra.mxu0 0.0
    %771 = vmatprep.subr.mxu0 0.0
    %772 = vmatpush1.msra.mxu0 0.0
    %773 = vmatprep.subr.mxu0 0.0
    %774 = vmatpush1.msra.mxu0 0.0
    %775 = vmatprep.subr.mxu0 0.0
    %776 = vmatpush1.msra.mxu0 0.0
    %777 = vmatprep.subr.mxu0 0.0
    %778 = vmatpush1.msra.mxu0 0.0
    %779 = vmatprep.subr.mxu0 0.0
    %780 = vmatpush1.msra.mxu0 0.0
    %781 = vmatprep.subr.mxu0 0.0
    %782 = vmatpush1.msra.mxu0 0.0
    %783 = vmatprep.subr.mxu0 0.0
    %784 = vmatpush1.msra.mxu0 0.0
    %785 = vmatprep.subr.mxu0 0.0
    %786 = vmatpush1.msra.mxu0 0.0
    %787 = vmatprep.subr.mxu0 0.0
    %788 = vmatpush1.msra.mxu0 0.0
    %789 = vmatprep.subr.mxu0 0.0
    %790 = vmatpush1.msra.mxu0 0.0
    %791 = vmatprep.mubr.f32.mxu0 0.0
    %v792 = vand.u32 %v547, 4294901760
    %v793 = vsub.f32 %v547, %v792
    %794 = vmatmul.mubr.f32.gmra.mrb[0].mxu0 %v793
    %v795 = vpop.f32.mrb[0].mxu0
    %v796 = vadd.f32 %v716, %v795
    %v797 = vpop.f32.mrb[0].mxu0
    %798 = vdwg.mxu0
    %799 = vmatprep.subr.mxu0 0.0
    %v800 = vand.u32 %v38, 4294901760
    %801 = vmatpush1.msra.mxu0 %v800
    %802 = vmatprep.subr.mxu0 0.0
    %v803 = vand.u32 %v39, 4294901760
    %804 = vmatpush1.msra.mxu0 %v803
    %805 = vmatprep.subr.mxu0 0.0
    %v806 = vand.u32 %v40, 4294901760
    %807 = vmatpush1.msra.mxu0 %v806
    %808 = vmatprep.subr.mxu0 0.0
    %v809 = vand.u32 %v41, 4294901760
    %810 = vmatpush1.msra.mxu0 %v809
    %811 = vmatprep.subr.mxu0 0.0
    %812 = vmatpush1.msra.mxu0 0.0
    %813 = vmatprep.subr.mxu0 0.0
    %814 = vmatpush1.msra.mxu0 0.0
    %815 = vmatprep.subr.mxu0 0.0
    %816 = vmatpush1.msra.mxu0 0.0
    %817 = vmatprep.subr.mxu0 0.0
    %818 = vmatpush1.msra.mxu0 0.0
    %819 = vmatprep.subr.mxu0 0.0
    %820 = vmatpush1.msra.mxu0 0.0
    %821 = vmatprep.subr.mxu0 0.0
    %822 = vmatpush1.msra.mxu0 0.0
    %823 = vmatprep.subr.mxu0 0.0
    %824 = vmatpush1.msra.mxu0 0.0
    %825 = vmatprep.subr.mxu0 0.0
    %826 = vmatpush1.msra.mxu0 0.0
    %827 = vmatprep.subr.mxu0 0.0
    %828 = vmatpush1.msra.mxu0 0.0
    %829 = vmatprep.subr.mxu0 0.0
    %830 = vmatpush1.msra.mxu0 0.0
    %831 = vmatprep.subr.mxu0 0.0
    %832 = vmatpush1.msra.mxu0 0.0
    %833 = vmatprep.subr.mxu0 0.0
    %834 = vmatpush1.msra.mxu0 0.0
    %835 = vmatprep.subr.mxu0 0.0
    %836 = vmatpush1.msra.mxu0 0.0
    %837 = vmatprep.subr.mxu0 0.0
    %838 = vmatpush1.msra.mxu0 0.0
    %839 = vmatprep.subr.mxu0 0.0
    %840 = vmatpush1.msra.mxu0 0.0
    %841 = vmatprep.subr.mxu0 0.0
    %842 = vmatpush1.msra.mxu0 0.0
    %843 = vmatprep.subr.mxu0 0.0
    %844 = vmatpush1.msra.mxu0 0.0
    %845 = vmatprep.subr.mxu0 0.0
    %846 = vmatpush1.msra.mxu0 0.0
    %847 = vmatprep.subr.mxu0 0.0
    %848 = vmatpush1.msra.mxu0 0.0
    %849 = vmatprep.subr.mxu0 0.0
    %850 = vmatpush1.msra.mxu0 0.0
    %851 = vmatprep.subr.mxu0 0.0
    %852 = vmatpush1.msra.mxu0 0.0
    %853 = vmatprep.subr.mxu0 0.0
    %854 = vmatpush1.msra.mxu0 0.0
    %855 = vmatprep.subr.mxu0 0.0
    %856 = vmatpush1.msra.mxu0 0.0
    %857 = vmatprep.subr.mxu0 0.0
    %858 = vmatpush1.msra.mxu0 0.0
    %859 = vmatprep.subr.mxu0 0.0
    %860 = vmatpush1.msra.mxu0 0.0
    %861 = vmatprep.subr.mxu0 0.0
    %862 = vmatpush1.msra.mxu0 0.0
    %863 = vmatprep.subr.mxu0 0.0
    %864 = vmatpush1.msra.mxu0 0.0
    %865 = vmatprep.subr.mxu0 0.0
    %866 = vmatpush1.msra.mxu0 0.0
    %867 = vmatprep.mubr.f32.mxu0 0.0
    %v868 = vand.u32 %v547, 4294901760
    %v869 = vsub.f32 %v547, %v868
    %v870 = vand.u32 %v869, 4294901760
    %871 = vmatmul.mubr.f32.gmra.mrb[0].mxu0 %v870
    %v872 = vpop.f32.mrb[0].mxu0
    %v873 = vadd.f32 %v796, %v872
    %v874 = vpop.f32.mrb[0].mxu0
    %875 = vdwg.mxu0
    %876 = vmatprep.subr.mxu0 0.0
    %v877 = vand.u32 %v38, 4294901760
    %v878 = vsub.f32 %v38, %v877
    %v879 = vand.u32 %v878, 4294901760
    %880 = vmatpush1.msra.mxu0 %v879
    %881 = vmatprep.subr.mxu0 0.0
    %v882 = vand.u32 %v39, 4294901760
    %v883 = vsub.f32 %v39, %v882
    %v884 = vand.u32 %v883, 4294901760
    %885 = vmatpush1.msra.mxu0 %v884
    %886 = vmatprep.subr.mxu0 0.0
    %v887 = vand.u32 %v40, 4294901760
    %v888 = vsub.f32 %v40, %v887
    %v889 = vand.u32 %v888, 4294901760
    %890 = vmatpush1.msra.mxu0 %v889
    %891 = vmatprep.subr.mxu0 0.0
    %v892 = vand.u32 %v41, 4294901760
    %v893 = vsub.f32 %v41, %v892
    %v894 = vand.u32 %v893, 4294901760
    %895 = vmatpush1.msra.mxu0 %v894
    %896 = vmatprep.subr.mxu0 0.0
    %897 = vmatpush1.msra.mxu0 0.0
    %898 = vmatprep.subr.mxu0 0.0
    %899 = vmatpush1.msra.mxu0 0.0
    %900 = vmatprep.subr.mxu0 0.0
    %901 = vmatpush1.msra.mxu0 0.0
    %902 = vmatprep.subr.mxu0 0.0
    %903 = vmatpush1.msra.mxu0 0.0
    %904 = vmatprep.subr.mxu0 0.0
    %905 = vmatpush1.msra.mxu0 0.0
    %906 = vmatprep.subr.mxu0 0.0
    %907 = vmatpush1.msra.mxu0 0.0
    %908 = vmatprep.subr.mxu0 0.0
    %909 = vmatpush1.msra.mxu0 0.0
    %910 = vmatprep.subr.mxu0 0.0
    %911 = vmatpush1.msra.mxu0 0.0
    %912 = vmatprep.subr.mxu0 0.0
    %913 = vmatpush1.msra.mxu0 0.0
    %914 = vmatprep.subr.mxu0 0.0
    %915 = vmatpush1.msra.mxu0 0.0
    %916 = vmatprep.subr.mxu0 0.0
    %917 = vmatpush1.msra.mxu0 0.0
    %918 = vmatprep.subr.mxu0 0.0
    %919 = vmatpush1.msra.mxu0 0.0
    %920 = vmatprep.subr.mxu0 0.0
    %921 = vmatpush1.msra.mxu0 0.0
    %922 = vmatprep.subr.mxu0 0.0
    %923 = vmatpush1.msra.mxu0 0.0
    %924 = vmatprep.subr.mxu0 0.0
    %925 = vmatpush1.msra.mxu0 0.0
    %926 = vmatprep.subr.mxu0 0.0
    %927 = vmatpush1.msra.mxu0 0.0
    %928 = vmatprep.subr.mxu0 0.0
    %929 = vmatpush1.msra.mxu0 0.0
    %930 = vmatprep.subr.mxu0 0.0
    %931 = vmatpush1.msra.mxu0 0.0
    %932 = vmatprep.subr.mxu0 0.0
    %933 = vmatpush1.msra.mxu0 0.0
    %934 = vmatprep.subr.mxu0 0.0
    %935 = vmatpush1.msra.mxu0 0.0
    %936 = vmatprep.subr.mxu0 0.0
    %937 = vmatpush1.msra.mxu0 0.0
    %938 = vmatprep.subr.mxu0 0.0
    %939 = vmatpush1.msra.mxu0 0.0
    %940 = vmatprep.subr.mxu0 0.0
    %941 = vmatpush1.msra.mxu0 0.0
    %942 = vmatprep.subr.mxu0 0.0
    %943 = vmatpush1.msra.mxu0 0.0
    %944 = vmatprep.subr.mxu0 0.0
    %945 = vmatpush1.msra.mxu0 0.0
    %946 = vmatprep.subr.mxu0 0.0
    %947 = vmatpush1.msra.mxu0 0.0
    %948 = vmatprep.subr.mxu0 0.0
    %949 = vmatpush1.msra.mxu0 0.0
    %950 = vmatprep.subr.mxu0 0.0
    %951 = vmatpush1.msra.mxu0 0.0
    %952 = vmatprep.mubr.f32.mxu0 0.0
    %v953 = vand.u32 %v547, 4294901760
    %954 = vmatmul.mubr.f32.gmra.mrb[0].mxu0 %v953
    %v955 = vpop.f32.mrb[0].mxu0
    %v956 = vadd.f32 %v873, %v955
    %v957 = vpop.f32.mrb[0].mxu0
    %958 = vdwg.mxu0
    %959 = vmatprep.subr.mxu0 0.0
    %v960 = vand.u32 %v38, 4294901760
    %961 = vmatpush1.msra.mxu0 %v960
    %962 = vmatprep.subr.mxu0 0.0
    %v963 = vand.u32 %v39, 4294901760
    %964 = vmatpush1.msra.mxu0 %v963
    %965 = vmatprep.subr.mxu0 0.0
    %v966 = vand.u32 %v40, 4294901760
    %967 = vmatpush1.msra.mxu0 %v966
    %968 = vmatprep.subr.mxu0 0.0
    %v969 = vand.u32 %v41, 4294901760
    %970 = vmatpush1.msra.mxu0 %v969
    %971 = vmatprep.subr.mxu0 0.0
    %972 = vmatpush1.msra.mxu0 0.0
    %973 = vmatprep.subr.mxu0 0.0
    %974 = vmatpush1.msra.mxu0 0.0
    %975 = vmatprep.subr.mxu0 0.0
    %976 = vmatpush1.msra.mxu0 0.0
    %977 = vmatprep.subr.mxu0 0.0
    %978 = vmatpush1.msra.mxu0 0.0
    %979 = vmatprep.subr.mxu0 0.0
    %980 = vmatpush1.msra.mxu0 0.0
    %981 = vmatprep.subr.mxu0 0.0
    %982 = vmatpush1.msra.mxu0 0.0
    %983 = vmatprep.subr.mxu0 0.0
    %984 = vmatpush1.msra.mxu0 0.0
    %985 = vmatprep.subr.mxu0 0.0
    %986 = vmatpush1.msra.mxu0 0.0
    %987 = vmatprep.subr.mxu0 0.0
    %988 = vmatpush1.msra.mxu0 0.0
    %989 = vmatprep.subr.mxu0 0.0
    %990 = vmatpush1.msra.mxu0 0.0
    %991 = vmatprep.subr.mxu0 0.0
    %992 = vmatpush1.msra.mxu0 0.0
    %993 = vmatprep.subr.mxu0 0.0
    %994 = vmatpush1.msra.mxu0 0.0
    %995 = vmatprep.subr.mxu0 0.0
    %996 = vmatpush1.msra.mxu0 0.0
    %997 = vmatprep.subr.mxu0 0.0
    %998 = vmatpush1.msra.mxu0 0.0
    %999 = vmatprep.subr.mxu0 0.0
    %1000 = vmatpush1.msra.mxu0 0.0
    %1001 = vmatprep.subr.mxu0 0.0
    %1002 = vmatpush1.msra.mxu0 0.0
    %1003 = vmatprep.subr.mxu0 0.0
    %1004 = vmatpush1.msra.mxu0 0.0
    %1005 = vmatprep.subr.mxu0 0.0
    %1006 = vmatpush1.msra.mxu0 0.0
    %1007 = vmatprep.subr.mxu0 0.0
    %1008 = vmatpush1.msra.mxu0 0.0
    %1009 = vmatprep.subr.mxu0 0.0
    %1010 = vmatpush1.msra.mxu0 0.0
    %1011 = vmatprep.subr.mxu0 0.0
    %1012 = vmatpush1.msra.mxu0 0.0
    %1013 = vmatprep.subr.mxu0 0.0
    %1014 = vmatpush1.msra.mxu0 0.0
    %1015 = vmatprep.subr.mxu0 0.0
    %1016 = vmatpush1.msra.mxu0 0.0
    %1017 = vmatprep.subr.mxu0 0.0
    %1018 = vmatpush1.msra.mxu0 0.0
    %1019 = vmatprep.subr.mxu0 0.0
    %1020 = vmatpush1.msra.mxu0 0.0
    %1021 = vmatprep.subr.mxu0 0.0
    %1022 = vmatpush1.msra.mxu0 0.0
    %1023 = vmatprep.subr.mxu0 0.0
    %1024 = vmatpush1.msra.mxu0 0.0
    %1025 = vmatprep.subr.mxu0 0.0
    %1026 = vmatpush1.msra.mxu0 0.0
    %1027 = vmatprep.mubr.f32.mxu0 0.0
    %v1028 = vand.u32 %v547, 4294901760
    %1029 = vmatmul.mubr.f32.gmra.mrb[0].mxu0 %v1028
    %v1030 = vpop.f32.mrb[0].mxu0
    %v1031 = vadd.f32 %v956, %v1030
    %v1032 = vpop.f32.mrb[0].mxu0
    %1033 = vdwg.mxu0
    %v1034 = vadd.f32 %v1031, %v50
    %v1035 = vxor.u32 %v1034, 2147483648
    %v1036 = vmul.f32 %v1035, 1.442695
    %v1037 = vpow.pop %v1036
    %v1038 = vadd.f32 %v1037, 1.0
    %v1039 = vrcp.pop %v1038
    %v1040 = vmul.f32 1.0, %v1039
    %1042 = vrot.lane.b32.xlu0 %v1034, 32
    %v1043 = vpop.permute.xlu0 %1042
    %v1045 = vmul.f32 %v1040, %v1043
    %1047 = vrot.lane.b32.xlu0 %v1045, 64
    %v1048 = vpop.permute.xlu0 %1047
    %v1050 = vadd.f32 %v1034, %v1048
    %v1051 = vtanh.pop %v1050
    %v1052 = vsub.f32 1.0, %v1040
    %1054 = vrot.lane.b32.xlu0 %v1051, 96
    %v1055 = vpop.permute.xlu0 %1054
    %v1057 = vmul.f32 %v1052, %v1055
    %v1058 = vlaneseq
    %v1059 = vshrl.u32 %v1058, 7
    %v1060 = vsub.s32 0, %v1059
    %v1061 = vrot.slane %v56, %v1060
    %1062 = vrot.lane.b32.xlu0 %v1061, 32
    %v1063 = vpop.permute.xlu0 %1062
    %v1065 = vmul.f32 %v1040, %v1063
    %v1066 = vadd.f32 %v1057, %v1065
    %1068 = vrot.lane.b32.xlu0 %v1066, 96
    %v1069 = vpop.permute.xlu0 %1068
    %vm1071 = vcmask 253952
    %1072 = vst.msk [vmem:[#allocation2] sm:$0x1] %vm1071, %v1069
    %v1073 = vsel %vm57, %v1069, 0
    %1075 = vmatprep.subr.mxu0 0.0
    %v1076 = vand.u32 %v46, 4294901760
    %1077 = vmatpush1.msra.mxu0 %v1076
    %1078 = vmatprep.subr.mxu0 0.0
    %v1079 = vand.u32 %v47, 4294901760
    %1080 = vmatpush1.msra.mxu0 %v1079
    %1081 = vmatprep.subr.mxu0 0.0
    %v1082 = vand.u32 %v48, 4294901760
    %1083 = vmatpush1.msra.mxu0 %v1082
    %1084 = vmatprep.subr.mxu0 0.0
    %v1085 = vand.u32 %v49, 4294901760
    %1086 = vmatpush1.msra.mxu0 %v1085
    %1087 = vmatprep.subr.mxu0 0.0
    %1088 = vmatpush1.msra.mxu0 0.0
    %1089 = vmatprep.subr.mxu0 0.0
    %1090 = vmatpush1.msra.mxu0 0.0
    %1091 = vmatprep.subr.mxu0 0.0
    %1092 = vmatpush1.msra.mxu0 0.0
    %1093 = vmatprep.subr.mxu0 0.0
    %1094 = vmatpush1.msra.mxu0 0.0
    %1095 = vmatprep.subr.mxu0 0.0
    %1096 = vmatpush1.msra.mxu0 0.0
    %1097 = vmatprep.subr.mxu0 0.0
    %1098 = vmatpush1.msra.mxu0 0.0
    %1099 = vmatprep.subr.mxu0 0.0
    %1100 = vmatpush1.msra.mxu0 0.0
    %1101 = vmatprep.subr.mxu0 0.0
    %1102 = vmatpush1.msra.mxu0 0.0
    %1103 = vmatprep.subr.mxu0 0.0
    %1104 = vmatpush1.msra.mxu0 0.0
    %1105 = vmatprep.subr.mxu0 0.0
    %1106 = vmatpush1.msra.mxu0 0.0
    %1107 = vmatprep.subr.mxu0 0.0
    %1108 = vmatpush1.msra.mxu0 0.0
    %1109 = vmatprep.subr.mxu0 0.0
    %1110 = vmatpush1.msra.mxu0 0.0
    %1111 = vmatprep.subr.mxu0 0.0
    %1112 = vmatpush1.msra.mxu0 0.0
    %1113 = vmatprep.subr.mxu0 0.0
    %1114 = vmatpush1.msra.mxu0 0.0
    %1115 = vmatprep.subr.mxu0 0.0
    %1116 = vmatpush1.msra.mxu0 0.0
    %1117 = vmatprep.subr.mxu0 0.0
    %1118 = vmatpush1.msra.mxu0 0.0
    %1119 = vmatprep.subr.mxu0 0.0
    %1120 = vmatpush1.msra.mxu0 0.0
    %1121 = vmatprep.subr.mxu0 0.0
    %1122 = vmatpush1.msra.mxu0 0.0
    %1123 = vmatprep.subr.mxu0 0.0
    %1124 = vmatpush1.msra.mxu0 0.0
    %1125 = vmatprep.subr.mxu0 0.0
    %1126 = vmatpush1.msra.mxu0 0.0
    %1127 = vmatprep.subr.mxu0 0.0
    %1128 = vmatpush1.msra.mxu0 0.0
    %1129 = vmatprep.subr.mxu0 0.0
    %1130 = vmatpush1.msra.mxu0 0.0
    %1131 = vmatprep.subr.mxu0 0.0
    %1132 = vmatpush1.msra.mxu0 0.0
    %1133 = vmatprep.subr.mxu0 0.0
    %1134 = vmatpush1.msra.mxu0 0.0
    %1135 = vmatprep.subr.mxu0 0.0
    %1136 = vmatpush1.msra.mxu0 0.0
    %1137 = vmatprep.subr.mxu0 0.0
    %1138 = vmatpush1.msra.mxu0 0.0
    %1139 = vmatprep.subr.mxu0 0.0
    %1140 = vmatpush1.msra.mxu0 0.0
    %1141 = vmatprep.subr.mxu0 0.0
    %1142 = vmatpush1.msra.mxu0 0.0
    %1143 = vmatprep.mubr.f32.mxu0 0.0
    %v1144 = vand.u32 %v1073, 4294901760
    %v1145 = vsub.f32 %v1073, %v1144
    %v1146 = vand.u32 %v1145, 4294901760
    %v1147 = vsub.f32 %v1145, %v1146
    %v1148 = vand.u32 %v1147, 4294901760
    %1149 = vmatmul.mubr.f32.gmra.mrb[0].mxu0 %v1148
    %v1150 = vpop.f32.mrb[0].mxu0
    %v1151 = vadd.f32 %v51, %v1150
    %v1152 = vpop.f32.mrb[0].mxu0
    %1153 = vdwg.mxu0
    %1154 = vmatprep.subr.mxu0 0.0
    %v1155 = vand.u32 %v46, 4294901760
    %v1156 = vsub.f32 %v46, %v1155
    %v1157 = vand.u32 %v1156, 4294901760
    %v1158 = vsub.f32 %v1156, %v1157
    %v1159 = vand.u32 %v1158, 4294901760
    %1160 = vmatpush1.msra.mxu0 %v1159
    %1161 = vmatprep.subr.mxu0 0.0
    %v1162 = vand.u32 %v47, 4294901760
    %v1163 = vsub.f32 %v47, %v1162
    %v1164 = vand.u32 %v1163, 4294901760
    %v1165 = vsub.f32 %v1163, %v1164
    %v1166 = vand.u32 %v1165, 4294901760
    %1167 = vmatpush1.msra.mxu0 %v1166
    %1168 = vmatprep.subr.mxu0 0.0
    %v1169 = vand.u32 %v48, 4294901760
    %v1170 = vsub.f32 %v48, %v1169
    %v1171 = vand.u32 %v1170, 4294901760
    %v1172 = vsub.f32 %v1170, %v1171
    %v1173 = vand.u32 %v1172, 4294901760
    %1174 = vmatpush1.msra.mxu0 %v1173
    %1175 = vmatprep.subr.mxu0 0.0
    %v1176 = vand.u32 %v49, 4294901760
    %v1177 = vsub.f32 %v49, %v1176
    %v1178 = vand.u32 %v1177, 4294901760
    %v1179 = vsub.f32 %v1177, %v1178
    %v1180 = vand.u32 %v1179, 4294901760
    %1181 = vmatpush1.msra.mxu0 %v1180
    %1182 = vmatprep.subr.mxu0 0.0
    %1183 = vmatpush1.msra.mxu0 0.0
    %1184 = vmatprep.subr.mxu0 0.0
    %1185 = vmatpush1.msra.mxu0 0.0
    %1186 = vmatprep.subr.mxu0 0.0
    %1187 = vmatpush1.msra.mxu0 0.0
    %1188 = vmatprep.subr.mxu0 0.0
    %1189 = vmatpush1.msra.mxu0 0.0
    %1190 = vmatprep.subr.mxu0 0.0
    %1191 = vmatpush1.msra.mxu0 0.0
    %1192 = vmatprep.subr.mxu0 0.0
    %1193 = vmatpush1.msra.mxu0 0.0
    %1194 = vmatprep.subr.mxu0 0.0
    %1195 = vmatpush1.msra.mxu0 0.0
    %1196 = vmatprep.subr.mxu0 0.0
    %1197 = vmatpush1.msra.mxu0 0.0
    %1198 = vmatprep.subr.mxu0 0.0
    %1199 = vmatpush1.msra.mxu0 0.0
    %1200 = vmatprep.subr.mxu0 0.0
    %1201 = vmatpush1.msra.mxu0 0.0
    %1202 = vmatprep.subr.mxu0 0.0
    %1203 = vmatpush1.msra.mxu0 0.0
    %1204 = vmatprep.subr.mxu0 0.0
    %1205 = vmatpush1.msra.mxu0 0.0
    %1206 = vmatprep.subr.mxu0 0.0
    %1207 = vmatpush1.msra.mxu0 0.0
    %1208 = vmatprep.subr.mxu0 0.0
    %1209 = vmatpush1.msra.mxu0 0.0
    %1210 = vmatprep.subr.mxu0 0.0
    %1211 = vmatpush1.msra.mxu0 0.0
    %1212 = vmatprep.subr.mxu0 0.0
    %1213 = vmatpush1.msra.mxu0 0.0
    %1214 = vmatprep.subr.mxu0 0.0
    %1215 = vmatpush1.msra.mxu0 0.0
    %1216 = vmatprep.subr.mxu0 0.0
    %1217 = vmatpush1.msra.mxu0 0.0
    %1218 = vmatprep.subr.mxu0 0.0
    %1219 = vmatpush1.msra.mxu0 0.0
    %1220 = vmatprep.subr.mxu0 0.0
    %1221 = vmatpush1.msra.mxu0 0.0
    %1222 = vmatprep.subr.mxu0 0.0
    %1223 = vmatpush1.msra.mxu0 0.0
    %1224 = vmatprep.subr.mxu0 0.0
    %1225 = vmatpush1.msra.mxu0 0.0
    %1226 = vmatprep.subr.mxu0 0.0
    %1227 = vmatpush1.msra.mxu0 0.0
    %1228 = vmatprep.subr.mxu0 0.0
    %1229 = vmatpush1.msra.mxu0 0.0
    %1230 = vmatprep.subr.mxu0 0.0
    %1231 = vmatpush1.msra.mxu0 0.0
    %1232 = vmatprep.subr.mxu0 0.0
    %1233 = vmatpush1.msra.mxu0 0.0
    %1234 = vmatprep.subr.mxu0 0.0
    %1235 = vmatpush1.msra.mxu0 0.0
    %1236 = vmatprep.subr.mxu0 0.0
    %1237 = vmatpush1.msra.mxu0 0.0
    %1238 = vmatprep.mubr.f32.mxu0 0.0
    %v1239 = vand.u32 %v1073, 4294901760
    %1240 = vmatmul.mubr.f32.gmra.mrb[0].mxu0 %v1239
    %v1241 = vpop.f32.mrb[0].mxu0
    %v1242 = vadd.f32 %v1151, %v1241
    %v1243 = vpop.f32.mrb[0].mxu0
    %1244 = vdwg.mxu0
    %1245 = vmatprep.subr.mxu0 0.0
    %v1246 = vand.u32 %v46, 4294901760
    %v1247 = vsub.f32 %v46, %v1246
    %1248 = vmatpush1.msra.mxu0 %v1247
    %1249 = vmatprep.subr.mxu0 0.0
    %v1250 = vand.u32 %v47, 4294901760
    %v1251 = vsub.f32 %v47, %v1250
    %1252 = vmatpush1.msra.mxu0 %v1251
    %1253 = vmatprep.subr.mxu0 0.0
    %v1254 = vand.u32 %v48, 4294901760
    %v1255 = vsub.f32 %v48, %v1254
    %1256 = vmatpush1.msra.mxu0 %v1255
    %1257 = vmatprep.subr.mxu0 0.0
    %v1258 = vand.u32 %v49, 4294901760
    %v1259 = vsub.f32 %v49, %v1258
    %1260 = vmatpush1.msra.mxu0 %v1259
    %1261 = vmatprep.subr.mxu0 0.0
    %1262 = vmatpush1.msra.mxu0 0.0
    %1263 = vmatprep.subr.mxu0 0.0
    %1264 = vmatpush1.msra.mxu0 0.0
    %1265 = vmatprep.subr.mxu0 0.0
    %1266 = vmatpush1.msra.mxu0 0.0
    %1267 = vmatprep.subr.mxu0 0.0
    %1268 = vmatpush1.msra.mxu0 0.0
    %1269 = vmatprep.subr.mxu0 0.0
    %1270 = vmatpush1.msra.mxu0 0.0
    %1271 = vmatprep.subr.mxu0 0.0
    %1272 = vmatpush1.msra.mxu0 0.0
    %1273 = vmatprep.subr.mxu0 0.0
    %1274 = vmatpush1.msra.mxu0 0.0
    %1275 = vmatprep.subr.mxu0 0.0
    %1276 = vmatpush1.msra.mxu0 0.0
    %1277 = vmatprep.subr.mxu0 0.0
    %1278 = vmatpush1.msra.mxu0 0.0
    %1279 = vmatprep.subr.mxu0 0.0
    %1280 = vmatpush1.msra.mxu0 0.0
    %1281 = vmatprep.subr.mxu0 0.0
    %1282 = vmatpush1.msra.mxu0 0.0
    %1283 = vmatprep.subr.mxu0 0.0
    %1284 = vmatpush1.msra.mxu0 0.0
    %1285 = vmatprep.subr.mxu0 0.0
    %1286 = vmatpush1.msra.mxu0 0.0
    %1287 = vmatprep.subr.mxu0 0.0
    %1288 = vmatpush1.msra.mxu0 0.0
    %1289 = vmatprep.subr.mxu0 0.0
    %1290 = vmatpush1.msra.mxu0 0.0
    %1291 = vmatprep.subr.mxu0 0.0
    %1292 = vmatpush1.msra.mxu0 0.0
    %1293 = vmatprep.subr.mxu0 0.0
    %1294 = vmatpush1.msra.mxu0 0.0
    %1295 = vmatprep.subr.mxu0 0.0
    %1296 = vmatpush1.msra.mxu0 0.0
    %1297 = vmatprep.subr.mxu0 0.0
    %1298 = vmatpush1.msra.mxu0 0.0
    %1299 = vmatprep.subr.mxu0 0.0
    %1300 = vmatpush1.msra.mxu0 0.0
    %1301 = vmatprep.subr.mxu0 0.0
    %1302 = vmatpush1.msra.mxu0 0.0
    %1303 = vmatprep.subr.mxu0 0.0
    %1304 = vmatpush1.msra.mxu0 0.0
    %1305 = vmatprep.subr.mxu0 0.0
    %1306 = vmatpush1.msra.mxu0 0.0
    %1307 = vmatprep.subr.mxu0 0.0
    %1308 = vmatpush1.msra.mxu0 0.0
    %1309 = vmatprep.subr.mxu0 0.0
    %1310 = vmatpush1.msra.mxu0 0.0
    %1311 = vmatprep.subr.mxu0 0.0
    %1312 = vmatpush1.msra.mxu0 0.0
    %1313 = vmatprep.subr.mxu0 0.0
    %1314 = vmatpush1.msra.mxu0 0.0
    %1315 = vmatprep.subr.mxu0 0.0
    %1316 = vmatpush1.msra.mxu0 0.0
    %1317 = vmatprep.mubr.f32.mxu0 0.0
    %v1318 = vand.u32 %v1073, 4294901760
    %v1319 = vsub.f32 %v1073, %v1318
    %1320 = vmatmul.mubr.f32.gmra.mrb[0].mxu0 %v1319
    %v1321 = vpop.f32.mrb[0].mxu0
    %v1322 = vadd.f32 %v1242, %v1321
    %v1323 = vpop.f32.mrb[0].mxu0
    %1324 = vdwg.mxu0
    %1325 = vmatprep.subr.mxu0 0.0
    %v1326 = vand.u32 %v46, 4294901760
    %1327 = vmatpush1.msra.mxu0 %v1326
    %1328 = vmatprep.subr.mxu0 0.0
    %v1329 = vand.u32 %v47, 4294901760
    %1330 = vmatpush1.msra.mxu0 %v1329
    %1331 = vmatprep.subr.mxu0 0.0
    %v1332 = vand.u32 %v48, 4294901760
    %1333 = vmatpush1.msra.mxu0 %v1332
    %1334 = vmatprep.subr.mxu0 0.0
    %v1335 = vand.u32 %v49, 4294901760
    %1336 = vmatpush1.msra.mxu0 %v1335
    %1337 = vmatprep.subr.mxu0 0.0
    %1338 = vmatpush1.msra.mxu0 0.0
    %1339 = vmatprep.subr.mxu0 0.0
    %1340 = vmatpush1.msra.mxu0 0.0
    %1341 = vmatprep.subr.mxu0 0.0
    %1342 = vmatpush1.msra.mxu0 0.0
    %1343 = vmatprep.subr.mxu0 0.0
    %1344 = vmatpush1.msra.mxu0 0.0
    %1345 = vmatprep.subr.mxu0 0.0
    %1346 = vmatpush1.msra.mxu0 0.0
    %1347 = vmatprep.subr.mxu0 0.0
    %1348 = vmatpush1.msra.mxu0 0.0
    %1349 = vmatprep.subr.mxu0 0.0
    %1350 = vmatpush1.msra.mxu0 0.0
    %1351 = vmatprep.subr.mxu0 0.0
    %1352 = vmatpush1.msra.mxu0 0.0
    %1353 = vmatprep.subr.mxu0 0.0
    %1354 = vmatpush1.msra.mxu0 0.0
    %1355 = vmatprep.subr.mxu0 0.0
    %1356 = vmatpush1.msra.mxu0 0.0
    %1357 = vmatprep.subr.mxu0 0.0
    %1358 = vmatpush1.msra.mxu0 0.0
    %1359 = vmatprep.subr.mxu0 0.0
    %1360 = vmatpush1.msra.mxu0 0.0
    %1361 = vmatprep.subr.mxu0 0.0
    %1362 = vmatpush1.msra.mxu0 0.0
    %1363 = vmatprep.subr.mxu0 0.0
    %1364 = vmatpush1.msra.mxu0 0.0
    %1365 = vmatprep.subr.mxu0 0.0
    %1366 = vmatpush1.msra.mxu0 0.0
    %1367 = vmatprep.subr.mxu0 0.0
    %1368 = vmatpush1.msra.mxu0 0.0
    %1369 = vmatprep.subr.mxu0 0.0
    %1370 = vmatpush1.msra.mxu0 0.0
    %1371 = vmatprep.subr.mxu0 0.0
    %1372 = vmatpush1.msra.mxu0 0.0
    %1373 = vmatprep.subr.mxu0 0.0
    %1374 = vmatpush1.msra.mxu0 0.0
    %1375 = vmatprep.subr.mxu0 0.0
    %1376 = vmatpush1.msra.mxu0 0.0
    %1377 = vmatprep.subr.mxu0 0.0
    %1378 = vmatpush1.msra.mxu0 0.0
    %1379 = vmatprep.subr.mxu0 0.0
    %1380 = vmatpush1.msra.mxu0 0.0
    %1381 = vmatprep.subr.mxu0 0.0
    %1382 = vmatpush1.msra.mxu0 0.0
    %1383 = vmatprep.subr.mxu0 0.0
    %1384 = vmatpush1.msra.mxu0 0.0
    %1385 = vmatprep.subr.mxu0 0.0
    %1386 = vmatpush1.msra.mxu0 0.0
    %1387 = vmatprep.subr.mxu0 0.0
    %1388 = vmatpush1.msra.mxu0 0.0
    %1389 = vmatprep.subr.mxu0 0.0
    %1390 = vmatpush1.msra.mxu0 0.0
    %1391 = vmatprep.subr.mxu0 0.0
    %1392 = vmatpush1.msra.mxu0 0.0
    %1393 = vmatprep.mubr.f32.mxu0 0.0
    %v1394 = vand.u32 %v1073, 4294901760
    %v1395 = vsub.f32 %v1073, %v1394
    %v1396 = vand.u32 %v1395, 4294901760
    %1397 = vmatmul.mubr.f32.gmra.mrb[0].mxu0 %v1396
    %v1398 = vpop.f32.mrb[0].mxu0
    %v1399 = vadd.f32 %v1322, %v1398
    %v1400 = vpop.f32.mrb[0].mxu0
    %1401 = vdwg.mxu0
    %1402 = vmatprep.subr.mxu0 0.0
    %v1403 = vand.u32 %v46, 4294901760
    %v1404 = vsub.f32 %v46, %v1403
    %v1405 = vand.u32 %v1404, 4294901760
    %1406 = vmatpush1.msra.mxu0 %v1405
    %1407 = vmatprep.subr.mxu0 0.0
    %v1408 = vand.u32 %v47, 4294901760
    %v1409 = vsub.f32 %v47, %v1408
    %v1410 = vand.u32 %v1409, 4294901760
    %1411 = vmatpush1.msra.mxu0 %v1410
    %1412 = vmatprep.subr.mxu0 0.0
    %v1413 = vand.u32 %v48, 4294901760
    %v1414 = vsub.f32 %v48, %v1413
    %v1415 = vand.u32 %v1414, 4294901760
    %1416 = vmatpush1.msra.mxu0 %v1415
    %1417 = vmatprep.subr.mxu0 0.0
    %v1418 = vand.u32 %v49, 4294901760
    %v1419 = vsub.f32 %v49, %v1418
    %v1420 = vand.u32 %v1419, 4294901760
    %1421 = vmatpush1.msra.mxu0 %v1420
    %1422 = vmatprep.subr.mxu0 0.0
    %1423 = vmatpush1.msra.mxu0 0.0
    %1424 = vmatprep.subr.mxu0 0.0
    %1425 = vmatpush1.msra.mxu0 0.0
    %1426 = vmatprep.subr.mxu0 0.0
    %1427 = vmatpush1.msra.mxu0 0.0
    %1428 = vmatprep.subr.mxu0 0.0
    %1429 = vmatpush1.msra.mxu0 0.0
    %1430 = vmatprep.subr.mxu0 0.0
    %1431 = vmatpush1.msra.mxu0 0.0
    %1432 = vmatprep.subr.mxu0 0.0
    %1433 = vmatpush1.msra.mxu0 0.0
    %1434 = vmatprep.subr.mxu0 0.0
    %1435 = vmatpush1.msra.mxu0 0.0
    %1436 = vmatprep.subr.mxu0 0.0
    %1437 = vmatpush1.msra.mxu0 0.0
    %1438 = vmatprep.subr.mxu0 0.0
    %1439 = vmatpush1.msra.mxu0 0.0
    %1440 = vmatprep.subr.mxu0 0.0
    %1441 = vmatpush1.msra.mxu0 0.0
    %1442 = vmatprep.subr.mxu0 0.0
    %1443 = vmatpush1.msra.mxu0 0.0
    %1444 = vmatprep.subr.mxu0 0.0
    %1445 = vmatpush1.msra.mxu0 0.0
    %1446 = vmatprep.subr.mxu0 0.0
    %1447 = vmatpush1.msra.mxu0 0.0
    %1448 = vmatprep.subr.mxu0 0.0
    %1449 = vmatpush1.msra.mxu0 0.0
    %1450 = vmatprep.subr.mxu0 0.0
    %1451 = vmatpush1.msra.mxu0 0.0
    %1452 = vmatprep.subr.mxu0 0.0
    %1453 = vmatpush1.msra.mxu0 0.0
    %1454 = vmatprep.subr.mxu0 0.0
    %1455 = vmatpush1.msra.mxu0 0.0
    %1456 = vmatprep.subr.mxu0 0.0
    %1457 = vmatpush1.msra.mxu0 0.0
    %1458 = vmatprep.subr.mxu0 0.0
    %1459 = vmatpush1.msra.mxu0 0.0
    %1460 = vmatprep.subr.mxu0 0.0
    %1461 = vmatpush1.msra.mxu0 0.0
    %1462 = vmatprep.subr.mxu0 0.0
    %1463 = vmatpush1.msra.mxu0 0.0
    %1464 = vmatprep.subr.mxu0 0.0
    %1465 = vmatpush1.msra.mxu0 0.0
    %1466 = vmatprep.subr.mxu0 0.0
    %1467 = vmatpush1.msra.mxu0 0.0
    %1468 = vmatprep.subr.mxu0 0.0
    %1469 = vmatpush1.msra.mxu0 0.0
    %1470 = vmatprep.subr.mxu0 0.0
    %1471 = vmatpush1.msra.mxu0 0.0
    %1472 = vmatprep.subr.mxu0 0.0
    %1473 = vmatpush1.msra.mxu0 0.0
    %1474 = vmatprep.subr.mxu0 0.0
    %1475 = vmatpush1.msra.mxu0 0.0
    %1476 = vmatprep.subr.mxu0 0.0
    %1477 = vmatpush1.msra.mxu0 0.0
    %1478 = vmatprep.mubr.f32.mxu0 0.0
    %v1479 = vand.u32 %v1073, 4294901760
    %1480 = vmatmul.mubr.f32.gmra.mrb[0].mxu0 %v1479
    %v1481 = vpop.f32.mrb[0].mxu0
    %v1482 = vadd.f32 %v1399, %v1481
    %v1483 = vpop.f32.mrb[0].mxu0
    %1484 = vdwg.mxu0
    %1485 = vmatprep.subr.mxu0 0.0
    %v1486 = vand.u32 %v46, 4294901760
    %1487 = vmatpush1.msra.mxu0 %v1486
    %1488 = vmatprep.subr.mxu0 0.0
    %v1489 = vand.u32 %v47, 4294901760
    %1490 = vmatpush1.msra.mxu0 %v1489
    %1491 = vmatprep.subr.mxu0 0.0
    %v1492 = vand.u32 %v48, 4294901760
    %1493 = vmatpush1.msra.mxu0 %v1492
    %1494 = vmatprep.subr.mxu0 0.0
    %v1495 = vand.u32 %v49, 4294901760
    %1496 = vmatpush1.msra.mxu0 %v1495
    %1497 = vmatprep.subr.mxu0 0.0
    %1498 = vmatpush1.msra.mxu0 0.0
    %1499 = vmatprep.subr.mxu0 0.0
    %1500 = vmatpush1.msra.mxu0 0.0
    %1501 = vmatprep.subr.mxu0 0.0
    %1502 = vmatpush1.msra.mxu0 0.0
    %1503 = vmatprep.subr.mxu0 0.0
    %1504 = vmatpush1.msra.mxu0 0.0
    %1505 = vmatprep.subr.mxu0 0.0
    %1506 = vmatpush1.msra.mxu0 0.0
    %1507 = vmatprep.subr.mxu0 0.0
    %1508 = vmatpush1.msra.mxu0 0.0
    %1509 = vmatprep.subr.mxu0 0.0
    %1510 = vmatpush1.msra.mxu0 0.0
    %1511 = vmatprep.subr.mxu0 0.0
    %1512 = vmatpush1.msra.mxu0 0.0
    %1513 = vmatprep.subr.mxu0 0.0
    %1514 = vmatpush1.msra.mxu0 0.0
    %1515 = vmatprep.subr.mxu0 0.0
    %1516 = vmatpush1.msra.mxu0 0.0
    %1517 = vmatprep.subr.mxu0 0.0
    %1518 = vmatpush1.msra.mxu0 0.0
    %1519 = vmatprep.subr.mxu0 0.0
    %1520 = vmatpush1.msra.mxu0 0.0
    %1521 = vmatprep.subr.mxu0 0.0
    %1522 = vmatpush1.msra.mxu0 0.0
    %1523 = vmatprep.subr.mxu0 0.0
    %1524 = vmatpush1.msra.mxu0 0.0
    %1525 = vmatprep.subr.mxu0 0.0
    %1526 = vmatpush1.msra.mxu0 0.0
    %1527 = vmatprep.subr.mxu0 0.0
    %1528 = vmatpush1.msra.mxu0 0.0
    %1529 = vmatprep.subr.mxu0 0.0
    %1530 = vmatpush1.msra.mxu0 0.0
    %1531 = vmatprep.subr.mxu0 0.0
    %1532 = vmatpush1.msra.mxu0 0.0
    %1533 = vmatprep.subr.mxu0 0.0
    %1534 = vmatpush1.msra.mxu0 0.0
    %1535 = vmatprep.subr.mxu0 0.0
    %1536 = vmatpush1.msra.mxu0 0.0
    %1537 = vmatprep.subr.mxu0 0.0
    %1538 = vmatpush1.msra.mxu0 0.0
    %1539 = vmatprep.subr.mxu0 0.0
    %1540 = vmatpush1.msra.mxu0 0.0
    %1541 = vmatprep.subr.mxu0 0.0
    %1542 = vmatpush1.msra.mxu0 0.0
    %1543 = vmatprep.subr.mxu0 0.0
    %1544 = vmatpush1.msra.mxu0 0.0
    %1545 = vmatprep.subr.mxu0 0.0
    %1546 = vmatpush1.msra.mxu0 0.0
    %1547 = vmatprep.subr.mxu0 0.0
    %1548 = vmatpush1.msra.mxu0 0.0
    %1549 = vmatprep.subr.mxu0 0.0
    %1550 = vmatpush1.msra.mxu0 0.0
    %1551 = vmatprep.subr.mxu0 0.0
    %1552 = vmatpush1.msra.mxu0 0.0
    %1553 = vmatprep.mubr.f32.mxu0 0.0
    %v1554 = vand.u32 %v1073, 4294901760
    %1555 = vmatmul.mubr.f32.gmra.mrb[0].mxu0 %v1554
    %v1556 = vpop.f32.mrb[0].mxu0
    %v1557 = vadd.f32 %v1482, %v1556
    %v1558 = vpop.f32.mrb[0].mxu0
    %1559 = vdwg.mxu0
    %vm1560 = vcmask 1040384
    %v1561 = vsel %vm1560, %v1557, -inf
    %1562 = vmax.xlane.f32.xlu0 %v1561
    %v1563 = vpop.xlane.xlu0 %1562
    %v1564 = vsub.f32 %v1557, %v1563
    %v1565 = vmul.f32 %v1564, 1.442695
    %v1566 = vpow.pop %v1565
    %v1567 = vsel %vm1560, %v1566, 0.0
    %1568 = vadd.xlane.f32.xlu0 %v1567
    %v1569 = vpop.xlane.xlu0 %1568
    %v1570 = vlog2.pop %v1569
    %v1571 = vmul.f32 %v1570, 0.6931472
    %v1572 = vadd.f32 %v1571, %v1563
    %v1573 = vsub.f32 %v1557, %v1572
    %1574 = vst [vmem:[%s3] sm:$0x1] %v1573
    // Predicated region
    $region18: #{decode_sequence.1} parent=1 // pred_check
      %p1575 = pneg %p30
    $region19: #{decode_sequence.1} parent=1 // pred_check_branch
      %1577 = sbr.rel (%p1575) target = $region21
    $region20: #{decode_sequence.1} parent=1 // pred_region
      %1578 = vst.msk [vmem:[#allocation8] sm:$0x1] %vm1071, %v1069
    $region21: #{decode_sequence.1} parent=1 // pred_fallthru
      _
    // Predicated region
    $region22: #{decode_sequence.1} parent=1 // pred_check
      _
    $region23: #{decode_sequence.1} parent=1 // pred_check_branch
      %1580 = sbr.rel (0) target = $region25
    $region24: #{decode_sequence.1} parent=1 // pred_region
      _
    $region25: #{decode_sequence.1} parent=1 // pred_fallthru
      _
    // Predicated region
    $region26: #{decode_sequence.1} parent=1 // pred_check
      _
    $region27: #{decode_sequence.1} parent=1 // pred_check_branch
      %1582 = sbr.rel (0) target = $region29
    $region28: #{decode_sequence.1} parent=1 // pred_region
      %s1584 = ssub.s32 16, 16
      %1585 = vsyncadd [#allocation7], %s1584
      %s1587 = sshll.u32 [#allocation8], 4
      %s1588 = int_to_ptr.vmem [resolvable:$true] %s1587
      %1590 = dma.vmem_to_hbm [thread:$0]  %s1588, 16, %s4, [#allocation7]
    $region29: #{decode_sequence.1} parent=1 // pred_fallthru
      _
    // Predicated region
    $region30: #{decode_sequence.1} parent=1 // pred_check
      _
    $region31: #{decode_sequence.1} parent=1 // pred_check_branch
      %1592 = sbr.rel (0) target = $region33
    $region32: #{decode_sequence.1} parent=1 // pred_region
      _
    $region33: #{decode_sequence.1} parent=1 // pred_fallthru
      _
    // Predicated region
    $region34: #{decode_sequence.1} parent=1 // pred_check
      _
    $region35: #{decode_sequence.1} parent=1 // pred_check_branch
      %1594 = sbr.rel (0) target = $region37
    $region36: #{decode_sequence.1} parent=1 // pred_region
      %1595 = dma.done [#allocation7], 16
    $region37: #{decode_sequence.1} parent=1 // pred_fallthru
      _
    %1596 = vsyncpa [#allocation6], 1
    %1597 = vsyncpa [#allocation7], 1

</llo_original>
